<compile_context>
chip_gen: v7x
topology: tpu7x:2x2x1
jax: 0.10.0
libtpu: 0.0.40
codegen_flags: <defaults>
</compile_context>

<pallas_src>
import functools

import jax
import jax.numpy as jnp
from jax.experimental import pallas as pl
from jax.experimental.pallas import tpu as pltpu


# ---------------- configuration (small, consistent with the module) ----------
EMBED_SIZE = 32
HIDDEN_SIZE = 32
NUM_HEADS = 4
DIM_PER_HEAD = HIDDEN_SIZE // NUM_HEADS
BATCH = 2
SEQ_Q = 8   # J
SEQ_K = 8   # K

_SCALE = 1.0 / (float(DIM_PER_HEAD) ** 0.5)


# ------------------------------ Pallas kernel --------------------------------
def _mha_kernel(x_ref, wqkv_ref, bqkv_ref, woh_ref, bo_ref, out_ref, attn_ref):
    # x_ref: (1, J + 2K, M) — rows [0:J] query, [J:J+K] key, [J+K:J+2K] value.
    J, K, M, H, DH, HID = SEQ_Q, SEQ_K, EMBED_SIZE, NUM_HEADS, DIM_PER_HEAD, HIDDEN_SIZE

    x = x_ref[0]                                                   # (J+2K, M)

    # Fused Q/K/V projection: one wide MXU matmul (J+2K, M) x (M, 3*HID).
    proj = (jnp.dot(x, wqkv_ref[...], preferred_element_type=jnp.float32)
            + bqkv_ref[...])                                       # (J+2K, 3*HID)

    # Extract the needed blocks (static slices). 1/sqrt(dh) folded into q.
    q = proj[0:J, 0:HID] * _SCALE                                  # (J, HID)
    k = proj[J:J + K, HID:2 * HID]                                 # (K, HID)
    v = proj[J + K:J + 2 * K, 2 * HID:3 * HID]                     # (K, HID)

    # Head-batched views: (H, seq, dh) with heads on the leading (batch) axis.
    qh = jnp.stack([q[:, h * DH:(h + 1) * DH] for h in range(H)], axis=0)  # (H, J, DH)
    kh = jnp.stack([k[:, h * DH:(h + 1) * DH] for h in range(H)], axis=0)  # (H, K, DH)
    vh = jnp.stack([v[:, h * DH:(h + 1) * DH] for h in range(H)], axis=0)  # (H, K, DH)

    # QK^T as one batched MXU op; numerically stable softmax over keys.
    logits = jnp.einsum('hjd,hkd->hjk', qh, kh,
                        preferred_element_type=jnp.float32)        # (H, J, K)
    m = jnp.max(logits, axis=-1, keepdims=True)
    e = jnp.exp(logits - m)
    s = jnp.sum(e, axis=-1, keepdims=True)
    p = e * pl.reciprocal(s, approx=True)                          # (H, J, K)

    # Single contiguous store of the attention weights.
    attn_ref[0] = p

    # attn @ V, batched over heads.
    ctx = jnp.einsum('hjk,hkd->hjd', p, vh,
                     preferred_element_type=jnp.float32)           # (H, J, DH)

    # Output projection folded per head (avoids the lane-axis concatenate):
    #   out = sum_h ctx[h] @ wo[h*dh:(h+1)*dh, :] + bo
    outh = jnp.einsum('hjd,hdm->hjm', ctx, woh_ref[...],
                      preferred_element_type=jnp.float32)          # (H, J, M)
    out_ref[0] = jnp.sum(outh, axis=0) + bo_ref[...]               # (J, M)


# ------------------------------ wrapper ---------------------------------------
@functools.partial(jax.jit, static_argnames=())
def multi_head_attention(query, key, value, params):
    """query (B,J,M), key/value (B,K,M).  Returns (out (B,J,M), attn (B,H,J,K))."""
    B, J, M = query.shape
    K = key.shape[1]
    H = NUM_HEADS
    hidden = HIDDEN_SIZE
    rows = J + 2 * K

    # Fuse Q/K/V weights and stack inputs so the kernel does one projection matmul.
    w_qkv = jnp.concatenate([params["wq"], params["wk"], params["wv"]], axis=1)  # (M, 3H)
    b_qkv = jnp.concatenate([params["bq"], params["bk"], params["bv"]], axis=1)  # (1, 3H)
    wo_h = params["wo"].reshape(H, DIM_PER_HEAD, M)                              # (H, dh, M)
    x_all = jnp.concatenate([query, key, value], axis=1)                         # (B, J+2K, M)

    grid_spec = pltpu.PrefetchScalarGridSpec(
        num_scalar_prefetch=0,
        grid=(B,),
        in_specs=[
            pl.BlockSpec((1, rows, M), lambda b: (b, 0, 0)),        # stacked q/k/v input
            pl.BlockSpec((M, 3 * hidden), lambda b: (0, 0)),        # fused wqkv
            pl.BlockSpec((1, 3 * hidden), lambda b: (0, 0)),        # fused bqkv
            pl.BlockSpec((H, DIM_PER_HEAD, M), lambda b: (0, 0, 0)),  # wo per head
            pl.BlockSpec((1, M), lambda b: (0, 0)),                 # bo
        ],
        out_specs=[
            pl.BlockSpec((1, J, M), lambda b: (b, 0, 0)),           # feature out
            pl.BlockSpec((1, H, J, K), lambda b: (b, 0, 0, 0)),     # attention weights
        ],
    )

    out_shape = (
        jax.ShapeDtypeStruct((B, J, M), jnp.float32),
        jax.ShapeDtypeStruct((B, H, J, K), jnp.float32),
    )

    return pl.pallas_call(
        _mha_kernel,
        grid_spec=grid_spec,
        out_shape=out_shape,
        compiler_params=pltpu.CompilerParams(dimension_semantics=("parallel",)),
    )(x_all, w_qkv, b_qkv, wo_h, params["bo"])


# ------------------------------ pure-JAX reference ----------------------------
def mha_reference(query, key, value, params):
    B, J, M = query.shape
    K = key.shape[1]
    H, dh = NUM_HEADS, DIM_PER_HEAD

    q = query @ params["wq"] + params["bq"]
    k = key @ params["wk"] + params["bk"]
    v = value @ params["wv"] + params["bv"]

    qh = q.reshape(B, J, H, dh).transpose(0, 2, 1, 3)
    kh = k.reshape(B, K, H, dh).transpose(0, 2, 1, 3)
    vh = v.reshape(B, K, H, dh).transpose(0, 2, 1, 3)

    logits = jnp.einsum("bhjd,bhkd->bhjk", qh, kh) / jnp.sqrt(jnp.float32(dh))
    attn = jax.nn.softmax(logits, axis=-1)
    ctx = jnp.einsum("bhjk,bhkd->bhjd", attn, vh)
    feat = ctx.transpose(0, 2, 1, 3).reshape(B, J, H * dh)
    out = feat @ params["wo"] + params["bo"]
    return out, attn


# ------------------------------ parameter init --------------------------------
def init_params(rng):
    def linear(rng, fan_in, fan_out):
        kw, kb = jax.random.split(rng)
        bound = 1.0 / (fan_in ** 0.5)
        w = jax.random.uniform(kw, (fan_in, fan_out), jnp.float32, -bound, bound)
        b = jax.random.uniform(kb, (1, fan_out), jnp.float32, -bound, bound)
        return w, b

    k1, k2, k3, k4 = jax.random.split(rng, 4)
    wq, bq = linear(k1, EMBED_SIZE, HIDDEN_SIZE)
    wk, bk = linear(k2, EMBED_SIZE, HIDDEN_SIZE)
    wv, bv = linear(k3, EMBED_SIZE, HIDDEN_SIZE)
    wo, bo = linear(k4, HIDDEN_SIZE, EMBED_SIZE)
    return dict(wq=wq, bq=bq, wk=wk, bk=bk, wv=wv, bv=bv, wo=wo, bo=bo)


if __name__ == "__main__":
    root = jax.random.PRNGKey(0)
    kp, kq, kk, kv = jax.random.split(root, 4)

    params = init_params(kp)
    query = jax.random.normal(kq, (BATCH, SEQ_Q, EMBED_SIZE), jnp.float32)
    key = jax.random.normal(kk, (BATCH, SEQ_K, EMBED_SIZE), jnp.float32)
    value = jax.random.normal(kv, (BATCH, SEQ_K, EMBED_SIZE), jnp.float32)

    out, attn = multi_head_attention(query, key, value, params)
    out = jax.block_until_ready(out)
    attn = jax.block_until_ready(attn)

    ref_out, ref_attn = mha_reference(query, key, value, params)
    assert out.shape == (BATCH, SEQ_Q, EMBED_SIZE)
    assert attn.shape == (BATCH, NUM_HEADS, SEQ_Q, SEQ_K)
    # Slightly looser tolerance because the softmax denominator uses the EUP's
    # approximate reciprocal (pl.reciprocal(..., approx=True)).
    assert jnp.allclose(out, ref_out, atol=2e-3, rtol=2e-3)
    assert jnp.allclose(attn, ref_attn, atol=2e-3, rtol=2e-3)

    print("KERNEL_OK")
</pallas_src>

<mosaic_0001>
module attributes {stable_mosaic.version = 11 : i64} {
  func.func @_mha_kernel(%arg0: i32, %arg1: memref<1x24x32xf32, #tpu.memory_space<vmem>>, %arg2: memref<32x96xf32, #tpu.memory_space<vmem>>, %arg3: memref<1x96xf32, #tpu.memory_space<vmem>>, %arg4: memref<4x8x32xf32, #tpu.memory_space<vmem>>, %arg5: memref<1x32xf32, #tpu.memory_space<vmem>>, %arg6: memref<1x8x32xf32, #tpu.memory_space<vmem>>, %arg7: memref<1x4x8x8xf32, #tpu.memory_space<vmem>>) attributes {dimension_semantics = [#tpu.dimension_semantics<parallel>], iteration_bounds = array<i64: 2>, scalar_prefetch = 0 : i64, scratch_operands = 0 : i64, tpu.core_type = #tpu.core_type<tc>, window_params = [{transform_indices = @transform_0, window_bounds = array<i64: 1, 24, 32>}, {pipeline_mode = #tpu.pipeline_mode<synchronous>, transform_indices = @transform_1, window_bounds = array<i64: 32, 96>}, {pipeline_mode = #tpu.pipeline_mode<synchronous>, transform_indices = @transform_2, window_bounds = array<i64: 1, 96>}, {pipeline_mode = #tpu.pipeline_mode<synchronous>, transform_indices = @transform_3, window_bounds = array<i64: 4, 8, 32>}, {pipeline_mode = #tpu.pipeline_mode<synchronous>, transform_indices = @transform_4, window_bounds = array<i64: 1, 32>}, {transform_indices = @transform_5, window_bounds = array<i64: 1, 8, 32>}, {transform_indices = @transform_6, window_bounds = array<i64: 1, 4, 8, 8>}]} {
    %c0 = arith.constant 0 : index
    %c0_0 = arith.constant 0 : index
    %c0_1 = arith.constant 0 : index
    %0 = vector.load %arg1[%c0, %c0_0, %c0_1] : memref<1x24x32xf32, #tpu.memory_space<vmem>>, vector<1x24x32xf32>
    %1 = vector.shape_cast %0 : vector<1x24x32xf32> to vector<24x32xf32>
    %c0_2 = arith.constant 0 : index
    %c0_3 = arith.constant 0 : index
    %2 = vector.load %arg2[%c0_2, %c0_3] : memref<32x96xf32, #tpu.memory_space<vmem>>, vector<32x96xf32>
    %cst = arith.constant dense<0.000000e+00> : vector<24x96xf32>
    %3 = tpu.matmul %1, %2, %cst {dimension_numbers = #tpu.dot_dimension_numbers<[1], [0], [0], [1], [0, 0, 1, 1], [], []>} : vector<24x32xf32>, vector<32x96xf32>, vector<24x96xf32> -> vector<24x96xf32>
    %c0_4 = arith.constant 0 : index
    %c0_5 = arith.constant 0 : index
    %4 = vector.load %arg3[%c0_4, %c0_5] : memref<1x96xf32, #tpu.memory_space<vmem>>, vector<1x96xf32>
    %5 = vector.broadcast %4 : vector<1x96xf32> to vector<24x96xf32>
    %6 = arith.addf %3, %5 : vector<24x96xf32>
    %7 = vector.extract_strided_slice %6 {offsets = [0, 0], sizes = [8, 32], strides = [1, 1]} : vector<24x96xf32> to vector<8x32xf32>
    %cst_6 = arith.constant 0.353553385 : f32
    %8 = vector.broadcast %cst_6 : f32 to vector<8x32xf32>
    %9 = arith.mulf %7, %8 : vector<8x32xf32>
    %10 = vector.extract_strided_slice %6 {offsets = [8, 32], sizes = [8, 32], strides = [1, 1]} : vector<24x96xf32> to vector<8x32xf32>
    %11 = vector.extract_strided_slice %6 {offsets = [16, 64], sizes = [8, 32], strides = [1, 1]} : vector<24x96xf32> to vector<8x32xf32>
    %12 = vector.extract_strided_slice %9 {offsets = [0, 0], sizes = [8, 8], strides = [1, 1]} : vector<8x32xf32> to vector<8x8xf32>
    %13 = vector.extract_strided_slice %9 {offsets = [0, 8], sizes = [8, 8], strides = [1, 1]} : vector<8x32xf32> to vector<8x8xf32>
    %14 = vector.extract_strided_slice %9 {offsets = [0, 16], sizes = [8, 8], strides = [1, 1]} : vector<8x32xf32> to vector<8x8xf32>
    %15 = vector.extract_strided_slice %9 {offsets = [0, 24], sizes = [8, 8], strides = [1, 1]} : vector<8x32xf32> to vector<8x8xf32>
    %16 = vector.shape_cast %12 : vector<8x8xf32> to vector<1x8x8xf32>
    %17 = vector.shape_cast %13 : vector<8x8xf32> to vector<1x8x8xf32>
    %18 = vector.shape_cast %14 : vector<8x8xf32> to vector<1x8x8xf32>
    %19 = vector.shape_cast %15 : vector<8x8xf32> to vector<1x8x8xf32>
    %20 = tpu.concatenate %16, %17, %18, %19 in 0 : vector<1x8x8xf32>, vector<1x8x8xf32>, vector<1x8x8xf32>, vector<1x8x8xf32> -> vector<4x8x8xf32>
    %21 = vector.extract_strided_slice %10 {offsets = [0, 0], sizes = [8, 8], strides = [1, 1]} : vector<8x32xf32> to vector<8x8xf32>
    %22 = vector.extract_strided_slice %10 {offsets = [0, 8], sizes = [8, 8], strides = [1, 1]} : vector<8x32xf32> to vector<8x8xf32>
    %23 = vector.extract_strided_slice %10 {offsets = [0, 16], sizes = [8, 8], strides = [1, 1]} : vector<8x32xf32> to vector<8x8xf32>
    %24 = vector.extract_strided_slice %10 {offsets = [0, 24], sizes = [8, 8], strides = [1, 1]} : vector<8x32xf32> to vector<8x8xf32>
    %25 = vector.shape_cast %21 : vector<8x8xf32> to vector<1x8x8xf32>
    %26 = vector.shape_cast %22 : vector<8x8xf32> to vector<1x8x8xf32>
    %27 = vector.shape_cast %23 : vector<8x8xf32> to vector<1x8x8xf32>
    %28 = vector.shape_cast %24 : vector<8x8xf32> to vector<1x8x8xf32>
    %29 = tpu.concatenate %25, %26, %27, %28 in 0 : vector<1x8x8xf32>, vector<1x8x8xf32>, vector<1x8x8xf32>, vector<1x8x8xf32> -> vector<4x8x8xf32>
    %30 = vector.extract_strided_slice %11 {offsets = [0, 0], sizes = [8, 8], strides = [1, 1]} : vector<8x32xf32> to vector<8x8xf32>
    %31 = vector.extract_strided_slice %11 {offsets = [0, 8], sizes = [8, 8], strides = [1, 1]} : vector<8x32xf32> to vector<8x8xf32>
    %32 = vector.extract_strided_slice %11 {offsets = [0, 16], sizes = [8, 8], strides = [1, 1]} : vector<8x32xf32> to vector<8x8xf32>
    %33 = vector.extract_strided_slice %11 {offsets = [0, 24], sizes = [8, 8], strides = [1, 1]} : vector<8x32xf32> to vector<8x8xf32>
    %34 = vector.shape_cast %30 : vector<8x8xf32> to vector<1x8x8xf32>
    %35 = vector.shape_cast %31 : vector<8x8xf32> to vector<1x8x8xf32>
    %36 = vector.shape_cast %32 : vector<8x8xf32> to vector<1x8x8xf32>
    %37 = vector.shape_cast %33 : vector<8x8xf32> to vector<1x8x8xf32>
    %38 = tpu.concatenate %34, %35, %36, %37 in 0 : vector<1x8x8xf32>, vector<1x8x8xf32>, vector<1x8x8xf32>, vector<1x8x8xf32> -> vector<4x8x8xf32>
    "tpu.trace_start"() <{level = 10 : i32, message = "hjd,hkd->hjk"}> : () -> ()
    %cst_7 = arith.constant dense<0.000000e+00> : vector<4x8x8xf32>
    %39 = tpu.matmul %20, %29, %cst_7 {dimension_numbers = #tpu.dot_dimension_numbers<[2], [2], [1], [1], [0, 0, 0, 1, 1, 1], [0], [0]>} : vector<4x8x8xf32>, vector<4x8x8xf32>, vector<4x8x8xf32> -> vector<4x8x8xf32>
    "tpu.trace_stop"() : () -> ()
    %cst_8 = arith.constant dense<0xFF800000> : vector<4x8xf32>
    %40 = vector.multi_reduction <maximumf>, %39, %cst_8 [2] : vector<4x8x8xf32> to vector<4x8xf32>
    %41 = vector.shape_cast %40 : vector<4x8xf32> to vector<4x8x1xf32>
    %42 = vector.broadcast %41 : vector<4x8x1xf32> to vector<4x8x8xf32>
    %43 = arith.subf %39, %42 : vector<4x8x8xf32>
    %44 = math.exp %43 : vector<4x8x8xf32>
    %cst_9 = arith.constant dense<0.000000e+00> : vector<4x8xf32>
    %45 = vector.multi_reduction <add>, %44, %cst_9 [2] : vector<4x8x8xf32> to vector<4x8xf32>
    %46 = vector.shape_cast %45 : vector<4x8xf32> to vector<4x8x1xf32>
    %47 = tpu.reciprocal %46 {approx = true} : vector<4x8x1xf32> -> vector<4x8x1xf32>
    %48 = vector.broadcast %47 : vector<4x8x1xf32> to vector<4x8x8xf32>
    %49 = arith.mulf %44, %48 : vector<4x8x8xf32>
    %c0_10 = arith.constant 0 : index
    %c0_11 = arith.constant 0 : index
    %c0_12 = arith.constant 0 : index
    %c0_13 = arith.constant 0 : index
    %50 = vector.load %arg7[%c0_10, %c0_11, %c0_12, %c0_13] : memref<1x4x8x8xf32, #tpu.memory_space<vmem>>, vector<1x4x8x8xf32>
    %51 = vector.shape_cast %50 : vector<1x4x8x8xf32> to vector<4x8x8xf32>
    %52 = vector.shape_cast %49 : vector<4x8x8xf32> to vector<1x4x8x8xf32>
    tpu.vector_store %arg7[%c0_10, %c0_11, %c0_12, %c0_13], %52 {strides = array<i32>} : memref<1x4x8x8xf32, #tpu.memory_space<vmem>>, vector<1x4x8x8xf32>,
    "tpu.trace_start"() <{level = 10 : i32, message = "hjk,hkd->hjd"}> : () -> ()
    %cst_14 = arith.constant dense<0.000000e+00> : vector<4x8x8xf32>
    %53 = tpu.matmul %49, %38, %cst_14 {dimension_numbers = #tpu.dot_dimension_numbers<[2], [1], [1], [2], [0, 0, 0, 1, 1, 2], [0], [0]>} : vector<4x8x8xf32>, vector<4x8x8xf32>, vector<4x8x8xf32> -> vector<4x8x8xf32>
    "tpu.trace_stop"() : () -> ()
    %c0_15 = arith.constant 0 : index
    %c0_16 = arith.constant 0 : index
    %c0_17 = arith.constant 0 : index
    %54 = vector.load %arg4[%c0_15, %c0_16, %c0_17] : memref<4x8x32xf32, #tpu.memory_space<vmem>>, vector<4x8x32xf32>
    "tpu.trace_start"() <{level = 10 : i32, message = "hjd,hdm->hjm"}> : () -> ()
    %cst_18 = arith.constant dense<0.000000e+00> : vector<4x8x32xf32>
    %55 = tpu.matmul %53, %54, %cst_18 {dimension_numbers = #tpu.dot_dimension_numbers<[2], [1], [1], [2], [0, 0, 0, 1, 1, 2], [0], [0]>} : vector<4x8x8xf32>, vector<4x8x32xf32>, vector<4x8x32xf32> -> vector<4x8x32xf32>
    "tpu.trace_stop"() : () -> ()
    %cst_19 = arith.constant dense<0.000000e+00> : vector<8x32xf32>
    %56 = vector.multi_reduction <add>, %55, %cst_19 [0] : vector<4x8x32xf32> to vector<8x32xf32>
    %c0_20 = arith.constant 0 : index
    %c0_21 = arith.constant 0 : index
    %57 = vector.load %arg5[%c0_20, %c0_21] : memref<1x32xf32, #tpu.memory_space<vmem>>, vector<1x32xf32>
    %58 = vector.broadcast %57 : vector<1x32xf32> to vector<8x32xf32>
    %59 = arith.addf %56, %58 : vector<8x32xf32>
    %c0_22 = arith.constant 0 : index
    %c0_23 = arith.constant 0 : index
    %c0_24 = arith.constant 0 : index
    %60 = vector.load %arg6[%c0_22, %c0_23, %c0_24] : memref<1x8x32xf32, #tpu.memory_space<vmem>>, vector<1x8x32xf32>
    %61 = vector.shape_cast %60 : vector<1x8x32xf32> to vector<8x32xf32>
    %62 = vector.shape_cast %59 : vector<8x32xf32> to vector<1x8x32xf32>
    tpu.vector_store %arg6[%c0_22, %c0_23, %c0_24], %62 {strides = array<i32>} : memref<1x8x32xf32, #tpu.memory_space<vmem>>, vector<1x8x32xf32>,
    return
  }
  func.func @transform_0(%arg0: i32) -> (i32, i32, i32) {
    %c0_i32 = arith.constant 0 : i32
    %c0_i32_0 = arith.constant 0 : i32
    %c0_i32_1 = arith.constant 0 : i32
    return %arg0, %c0_i32, %c0_i32_0 : i32, i32, i32
  }
  func.func @transform_1(%arg0: i32) -> (i32, i32) {
    %c0_i32 = arith.constant 0 : i32
    %c0_i32_0 = arith.constant 0 : i32
    %c0_i32_1 = arith.constant 0 : i32
    return %c0_i32, %c0_i32_0 : i32, i32
  }
  func.func @transform_2(%arg0: i32) -> (i32, i32) {
    %c0_i32 = arith.constant 0 : i32
    %c0_i32_0 = arith.constant 0 : i32
    %c0_i32_1 = arith.constant 0 : i32
    return %c0_i32, %c0_i32_0 : i32, i32
  }
  func.func @transform_3(%arg0: i32) -> (i32, i32, i32) {
    %c0_i32 = arith.constant 0 : i32
    %c0_i32_0 = arith.constant 0 : i32
    %c0_i32_1 = arith.constant 0 : i32
    %c0_i32_2 = arith.constant 0 : i32
    return %c0_i32, %c0_i32_0, %c0_i32_1 : i32, i32, i32
  }
  func.func @transform_4(%arg0: i32) -> (i32, i32) {
    %c0_i32 = arith.constant 0 : i32
    %c0_i32_0 = arith.constant 0 : i32
    %c0_i32_1 = arith.constant 0 : i32
    return %c0_i32, %c0_i32_0 : i32, i32
  }
  func.func @transform_5(%arg0: i32) -> (i32, i32, i32) {
    %c0_i32 = arith.constant 0 : i32
    %c0_i32_0 = arith.constant 0 : i32
    %c0_i32_1 = arith.constant 0 : i32
    return %arg0, %c0_i32, %c0_i32_0 : i32, i32, i32
  }
  func.func @transform_6(%arg0: i32) -> (i32, i32, i32, i32) {
    %c0_i32 = arith.constant 0 : i32
    %c0_i32_0 = arith.constant 0 : i32
    %c0_i32_1 = arith.constant 0 : i32
    %c0_i32_2 = arith.constant 0 : i32
    return %arg0, %c0_i32, %c0_i32_0, %c0_i32_1 : i32, i32, i32, i32
  }
}

</mosaic_0001>

<llo_original>
// kernel: multi_head_attention.1
$region0: #{multi_head_attention.1}
  #allocation0 [shape = 'u32[]', space=smem, size = 0x4, offset = 0x4, fixed_abs, tag = 'smem constant byte address 0x4 - core index']
  #allocation1 [shape = 'u32[144,128]{1,0:T(1,128)}', space=vmem, size = 0x12000, scoped, tag = 'internal scratch']
  %s0 = inlined_call_operand.vmem [shape: f32[2,24,32], index: 0, kind: input, shape index: {}]
  %s1 = inlined_call_operand.vmem [shape: f32[32,96], index: 1, kind: input, shape index: {}]
  %s2 = inlined_call_operand.vmem [shape: f32[1,96], index: 2, kind: input, shape index: {}]
  %s3 = inlined_call_operand.vmem [shape: f32[4,8,32], index: 3, kind: input, shape index: {}]
  %s4 = inlined_call_operand.vmem [shape: f32[1,32], index: 4, kind: input, shape index: {}]
  %s5 = inlined_call_operand.hbm [shape: f32[2,8,32], index: 5, kind: output, shape index: {0}]
  %s6 = inlined_call_operand.hbm [shape: f32[2,4,8,8], index: 6, kind: output, shape index: {1}]
  %7 = xla_tuple %s5, %s6
  %s8 = sld [smem:[#allocation0]]
  $region61: #{multi_head_attention.1} parent=0
    _
  %s10 = ssub.s32 1, %s8
  %s11 = scalar_select 0, %s10, %s8
  $region1: #{multi_head_attention.1} parent=0
    #allocation2 [shape = 'u8[8192]{0}', space=vmem, size = 0x2000, scoped, tag = 'output window, operand 0']
    #allocation3 [shape = 's32[2]{0}', space=sflag, size = 0x8, scoped, tag = 'scoped memory for multi_head_attention.1']
    #allocation4 [shape = 'u8[32768]{0}', space=vmem, size = 0x8000, scoped, tag = 'output window, operand 1']
    #allocation5 [shape = 's32[2]{0}', space=sflag, size = 0x8, scoped, tag = 'scoped memory for multi_head_attention.1']
    %12 = vsyncpa [#allocation3], 0
    %s13 = scalar_lea.sflag [#allocation3], 1
    %14 = vsyncpa %s13, 0
    %15 = vsyncpa [#allocation5], 0
    %s16 = scalar_lea.sflag [#allocation5], 1
    %17 = vsyncpa %s16, 0
    loop: start=0, step=1, limit=4
    $region2: #{multi_head_attention.1} parent=1 // loop_pre_header
      _
    $region3: #{multi_head_attention.1} parent=1 // loop_header
      %s19 = sphi 0, %s23
      %p20 = scmp.ge.s32.totalorder %s19, 4
      %s29 = sphi 0, %s31
      %s32 = sphi 0, %s29
      %s33 = sphi 0, %s32
      %s49 = sphi 0, %s33
      %s53 = sphi 0, %s53
      %s55 = sphi 0, %s53
      %s56 = sphi 0, %s55
      %s70 = sphi 0, %s56
      %s74 = sphi 0, %s74
      %s76 = sphi 0, %s74
      %s77 = sphi 0, %s76
      %s91 = sphi 0, %s77
      %s95 = sphi 0, %s95
      %s97 = sphi 0, %s95
      %s98 = sphi 0, %s97
      %s112 = sphi 0, %s98
      %s116 = sphi 0, %s116
      %s118 = sphi 0, %s116
      %s119 = sphi 0, %s118
      %s133 = sphi 0, %s119
      %s139 = sphi 0, %s141
      %s142 = sphi 0, %s139
      %s143 = sphi 0, %s142
      %s159 = sphi 0, %s143
      %s165 = sphi 0, %s167
      %s168 = sphi 0, %s165
      %s169 = sphi 0, %s168
      %s185 = sphi 0, %s169
    $region4: #{multi_head_attention.1} parent=1 // loop_header_branch
      %22 = sbr.rel (%p20) target = $region8
    $region5: #{multi_head_attention.1} parent=1 // loop_body
      %s24 = ssub.s32 %s19, 1
      %s25 = ssub.s32 %s19, 2
      %s26 = sadd.s32 %s19, 1
      %s27 = ssub.s32 %s19, %s26
      %p28 = scmp.eq.s32.totalorder %s27, 0
      %s30 = sadd.s32 %s29, 1
      %s31 = scalar_select %p28, %s29, %s30
      %p34 = pneg %p28
      %p35 = scmp.eq.s32.totalorder %s19, 1
      %p36 = por %p34, %p35
      %p37 = scmp.ne.s32.totalorder %s29, %s32
      %p38 = scmp.eq.s32.totalorder %s19, 0
      %p39 = por %p37, %p38
      %p40 = scmp.ne.s32.totalorder %s29, %s32
      %p41 = scmp.eq.s32.totalorder %s24, 1
      %p42 = por %p40, %p41
      %p43 = scmp.ne.s32.totalorder %s32, %s33
      %p44 = scmp.eq.s32.totalorder %s24, 0
      %p45 = por %p43, %p44
      %p46 = scmp.ne.s32.totalorder %s32, %s33
      %p47 = scmp.eq.s32.totalorder %s25, 1
      %p48 = por %p46, %p47
      %p50 = scmp.ne.s32.totalorder %s33, %s49
      %p51 = scmp.eq.s32.totalorder %s25, 0
      %p52 = por %p50, %p51
      %s54 = sadd.s32 %s53, 1
      %p57 = scmp.eq.s32.totalorder %s19, 1
      %p58 = scmp.ne.s32.totalorder %s53, %s55
      %p59 = scmp.eq.s32.totalorder %s19, 0
      %p60 = por %p58, %p59
      %p61 = scmp.ne.s32.totalorder %s53, %s55
      %p62 = scmp.eq.s32.totalorder %s24, 1
      %p63 = por %p61, %p62
      %p64 = scmp.ne.s32.totalorder %s55, %s56
      %p65 = scmp.eq.s32.totalorder %s24, 0
      %p66 = por %p64, %p65
      %p67 = scmp.ne.s32.totalorder %s55, %s56
      %p68 = scmp.eq.s32.totalorder %s25, 1
      %p69 = por %p67, %p68
      %p71 = scmp.ne.s32.totalorder %s56, %s70
      %p72 = scmp.eq.s32.totalorder %s25, 0
      %p73 = por %p71, %p72
      %s75 = sadd.s32 %s74, 1
      %p78 = scmp.eq.s32.totalorder %s19, 1
      %p79 = scmp.ne.s32.totalorder %s74, %s76
      %p80 = scmp.eq.s32.totalorder %s19, 0
      %p81 = por %p79, %p80
      %p82 = scmp.ne.s32.totalorder %s74, %s76
      %p83 = scmp.eq.s32.totalorder %s24, 1
      %p84 = por %p82, %p83
      %p85 = scmp.ne.s32.totalorder %s76, %s77
      %p86 = scmp.eq.s32.totalorder %s24, 0
      %p87 = por %p85, %p86
      %p88 = scmp.ne.s32.totalorder %s76, %s77
      %p89 = scmp.eq.s32.totalorder %s25, 1
      %p90 = por %p88, %p89
      %p92 = scmp.ne.s32.totalorder %s77, %s91
      %p93 = scmp.eq.s32.totalorder %s25, 0
      %p94 = por %p92, %p93
      %s96 = sadd.s32 %s95, 1
      %p99 = scmp.eq.s32.totalorder %s19, 1
      %p100 = scmp.ne.s32.totalorder %s95, %s97
      %p101 = scmp.eq.s32.totalorder %s19, 0
      %p102 = por %p100, %p101
      %p103 = scmp.ne.s32.totalorder %s95, %s97
      %p104 = scmp.eq.s32.totalorder %s24, 1
      %p105 = por %p103, %p104
      %p106 = scmp.ne.s32.totalorder %s97, %s98
      %p107 = scmp.eq.s32.totalorder %s24, 0
      %p108 = por %p106, %p107
      %p109 = scmp.ne.s32.totalorder %s97, %s98
      %p110 = scmp.eq.s32.totalorder %s25, 1
      %p111 = por %p109, %p110
      %p113 = scmp.ne.s32.totalorder %s98, %s112
      %p114 = scmp.eq.s32.totalorder %s25, 0
      %p115 = por %p113, %p114
      %s117 = sadd.s32 %s116, 1
      %p120 = scmp.eq.s32.totalorder %s19, 1
      %p121 = scmp.ne.s32.totalorder %s116, %s118
      %p122 = scmp.eq.s32.totalorder %s19, 0
      %p123 = por %p121, %p122
      %p124 = scmp.ne.s32.totalorder %s116, %s118
      %p125 = scmp.eq.s32.totalorder %s24, 1
      %p126 = por %p124, %p125
      %p127 = scmp.ne.s32.totalorder %s118, %s119
      %p128 = scmp.eq.s32.totalorder %s24, 0
      %p129 = por %p127, %p128
      %p130 = scmp.ne.s32.totalorder %s118, %s119
      %p131 = scmp.eq.s32.totalorder %s25, 1
      %p132 = por %p130, %p131
      %p134 = scmp.ne.s32.totalorder %s119, %s133
      %p135 = scmp.eq.s32.totalorder %s25, 0
      %p136 = por %p134, %p135
      %s137 = ssub.s32 %s19, %s26
      %p138 = scmp.eq.s32.totalorder %s137, 0
      %s140 = sadd.s32 %s139, 1
      %s141 = scalar_select %p138, %s139, %s140
      %p144 = pneg %p138
      %p145 = scmp.eq.s32.totalorder %s19, 1
      %p146 = por %p144, %p145
      %p147 = scmp.ne.s32.totalorder %s139, %s142
      %p148 = scmp.eq.s32.totalorder %s19, 0
      %p149 = por %p147, %p148
      %p150 = scmp.ne.s32.totalorder %s139, %s142
      %p151 = scmp.eq.s32.totalorder %s24, 1
      %p152 = por %p150, %p151
      %p153 = scmp.ne.s32.totalorder %s142, %s143
      %p154 = scmp.eq.s32.totalorder %s24, 0
      %p155 = por %p153, %p154
      %p156 = scmp.ne.s32.totalorder %s142, %s143
      %p157 = scmp.eq.s32.totalorder %s25, 1
      %p158 = por %p156, %p157
      %p160 = scmp.ne.s32.totalorder %s143, %s159
      %p161 = scmp.eq.s32.totalorder %s25, 0
      %p162 = por %p160, %p161
      %s163 = ssub.s32 %s19, %s26
      %p164 = scmp.eq.s32.totalorder %s163, 0
      %s166 = sadd.s32 %s165, 1
      %s167 = scalar_select %p164, %s165, %s166
      %p170 = pneg %p164
      %p171 = scmp.eq.s32.totalorder %s19, 1
      %p172 = por %p170, %p171
      %p173 = scmp.ne.s32.totalorder %s165, %s168
      %p174 = scmp.eq.s32.totalorder %s19, 0
      %p175 = por %p173, %p174
      %p176 = scmp.ne.s32.totalorder %s165, %s168
      %p177 = scmp.eq.s32.totalorder %s24, 1
      %p178 = por %p176, %p177
      %p179 = scmp.ne.s32.totalorder %s168, %s169
      %p180 = scmp.eq.s32.totalorder %s24, 0
      %p181 = por %p179, %p180
      %p182 = scmp.ne.s32.totalorder %s168, %s169
      %p183 = scmp.eq.s32.totalorder %s25, 1
      %p184 = por %p182, %p183
      %p186 = scmp.ne.s32.totalorder %s169, %s185
      %p187 = scmp.eq.s32.totalorder %s25, 0
      %p188 = por %p186, %p187
      %p189 = scmp.le.s32.totalorder 1, %s19
      %p190 = scmp.lt.s32.totalorder %s19, 3
      %p191 = pnand %p189, %p190
      %p192 = pneg %p191
      // Predicated region
      $region9: #{multi_head_attention.1} parent=5 // pred_check
        _
      $region10: #{multi_head_attention.1} parent=5 // pred_check_branch
        %194 = sbr.rel (%p191) target = $region12
      $region11: #{multi_head_attention.1} parent=5 // pred_region
        %s195 = ssub.s32 %s19, 1
        // Predicated region
        $region13: #{multi_head_attention.1} parent=11 // pred_check
          %p196 = pneg %p66
        $region14: #{multi_head_attention.1} parent=11 // pred_check_branch
          %198 = sbr.rel (%p196) target = $region16
        $region15: #{multi_head_attention.1} parent=11 // pred_region
          _
        $region16: #{multi_head_attention.1} parent=11 // pred_fallthru
          _
        // Predicated region
        $region17: #{multi_head_attention.1} parent=11 // pred_check
          %p199 = pneg %p87
        $region18: #{multi_head_attention.1} parent=11 // pred_check_branch
          %201 = sbr.rel (%p199) target = $region20
        $region19: #{multi_head_attention.1} parent=11 // pred_region
          _
        $region20: #{multi_head_attention.1} parent=11 // pred_fallthru
          _
        // Predicated region
        $region21: #{multi_head_attention.1} parent=11 // pred_check
          %p202 = pneg %p108
        $region22: #{multi_head_attention.1} parent=11 // pred_check_branch
          %204 = sbr.rel (%p202) target = $region24
        $region23: #{multi_head_attention.1} parent=11 // pred_region
          _
        $region24: #{multi_head_attention.1} parent=11 // pred_fallthru
          _
        // Predicated region
        $region25: #{multi_head_attention.1} parent=11 // pred_check
          %p205 = pneg %p129
        $region26: #{multi_head_attention.1} parent=11 // pred_check_branch
          %207 = sbr.rel (%p205) target = $region28
        $region27: #{multi_head_attention.1} parent=11 // pred_region
          _
        $region28: #{multi_head_attention.1} parent=11 // pred_fallthru
          _
      $region12: #{multi_head_attention.1} parent=5 // pred_fallthru
        _
      %p208 = scmp.lt.s32.totalorder %s19, 2
      // Predicated region
      $region29: #{multi_head_attention.1} parent=5 // pred_check
        %p209 = pneg %p208
      $region30: #{multi_head_attention.1} parent=5 // pred_check_branch
        %211 = sbr.rel (%p209) target = $region32
      $region31: #{multi_head_attention.1} parent=5 // pred_region
        // Predicated region
        $region33: #{multi_head_attention.1} parent=31 // pred_check
          %p212 = pneg %p39
        $region34: #{multi_head_attention.1} parent=31 // pred_check_branch
          %214 = sbr.rel (%p212) target = $region36
        $region35: #{multi_head_attention.1} parent=31 // pred_region
          %p215 = scmp.lt.s32.totalorder %s19, 1
          %s216 = scalar_select %p215, %s19, 1
          %s217 = smul.addr %s216, 3
          %s218 = smul.addr %s217, 8
          %s219 = scalar_lea.vmem %s0, %s218
        $region36: #{multi_head_attention.1} parent=31 // pred_fallthru
          _
      $region32: #{multi_head_attention.1} parent=5 // pred_fallthru
        _
      %p220 = scmp.le.s32.totalorder 1, %s19
      %p221 = scmp.lt.s32.totalorder %s19, 3
      %p222 = pnand %p220, %p221
      %p223 = pneg %p222
      // Predicated region
      $region37: #{multi_head_attention.1} parent=5 // pred_check
        _
      $region38: #{multi_head_attention.1} parent=5 // pred_check_branch
        %225 = sbr.rel (%p222) target = $region40
      $region39: #{multi_head_attention.1} parent=5 // pred_region
        %s226 = ssub.s32 %s19, 1
        %p227 = scmp.lt.s32.totalorder %s24, 1
        %s228 = scalar_select %p227, %s24, 1
        %s229 = smul.addr %s228, 3
        %s230 = smul.addr %s229, 8
        %s231 = scalar_lea.vmem %s0, %s230
        %p232 = pneg %p45
        %p233 = pneg %p42
        %p234 = pneg %p66
        %p235 = pneg %p63
        %p236 = pneg %p87
        %p237 = pneg %p84
        %p238 = pneg %p108
        %p239 = pneg %p105
        %p240 = pneg %p129
        %p241 = pneg %p126
        %p242 = pneg %p155
        %p243 = pneg %p152
        %s244 = sand.u32 %s142, 1
        %s245 = scalar_lea.sflag [#allocation3], %s244
        %s246 = sand.u32 %s142, 1
        %s247 = smul.addr %s246, 8
        %s248 = scalar_lea.vmem [#allocation2], %s247
        %p249 = pneg %p181
        %p250 = pneg %p178
        %s251 = sand.u32 %s168, 1
        %s252 = scalar_lea.sflag [#allocation5], %s251
        %s253 = sand.u32 %s168, 1
        %s254 = smul.addr %s253, 32
        %s255 = scalar_lea.vmem [#allocation4], %s254
        %p256 = scmp.lt.s32.totalorder %s24, 1
        %s257 = scalar_select %p256, %s24, 1
        %s258 = smul.addr %s257, 3
        %s259 = smul.addr %s258, 8
        %s260 = scalar_lea.vmem %s0, %s259
        %v261 = vld [vmem:[%s260] sm:$0xff]
        %v262 = vld [vmem:[%s260 + $0x8] sm:$0xff]
        %v263 = vld [vmem:[%s260 + $0x10] sm:$0xff]
        %v264 = vld [vmem:[%s1] sm:$0xff]
        %v265 = vld [vmem:[%s1 + $0x8] sm:$0xff]
        %v266 = vld [vmem:[%s1 + $0x10] sm:$0xff]
        %v267 = vld [vmem:[%s1 + $0x18] sm:$0xff]
        %v268 = vld [vmem:[%s2] sm:$0x1]
        %v270 = vlaneseq
        %v271 = vshrl.u32 %v270, 7
        %v272 = vsub.s32 0, %v271
        %v273 = vrot.slane %v268, %v272
        %vm275 = vcmask 261120
        %v277 = vsel %vm275, %v261, 0
        %v280 = vsel %vm275, %v262, 0
        %v283 = vsel %vm275, %v263, 0
        %285 = vmatprep.subr.mxu0 0.0
        %286 = vmatpush1.msra.mxu0 %v264
        %287 = vmatprep.subr.mxu0 0.0
        %288 = vmatpush1.msra.mxu0 %v265
        %289 = vmatprep.subr.mxu0 0.0
        %290 = vmatpush1.msra.mxu0 %v266
        %291 = vmatprep.subr.mxu0 0.0
        %292 = vmatpush1.msra.mxu0 %v267
        %293 = vmatprep.subr.mxu0 0.0
        %294 = vmatpush1.msra.mxu0 0.0
        %295 = vmatprep.subr.mxu0 0.0
        %296 = vmatpush1.msra.mxu0 0.0
        %297 = vmatprep.subr.mxu0 0.0
        %298 = vmatpush1.msra.mxu0 0.0
        %299 = vmatprep.subr.mxu0 0.0
        %300 = vmatpush1.msra.mxu0 0.0
        %301 = vmatprep.subr.mxu0 0.0
        %302 = vmatpush1.msra.mxu0 0.0
        %303 = vmatprep.subr.mxu0 0.0
        %304 = vmatpush1.msra.mxu0 0.0
        %305 = vmatprep.subr.mxu0 0.0
        %306 = vmatpush1.msra.mxu0 0.0
        %307 = vmatprep.subr.mxu0 0.0
        %308 = vmatpush1.msra.mxu0 0.0
        %309 = vmatprep.subr.mxu0 0.0
        %310 = vmatpush1.msra.mxu0 0.0
        %311 = vmatprep.subr.mxu0 0.0
        %312 = vmatpush1.msra.mxu0 0.0
        %313 = vmatprep.subr.mxu0 0.0
        %314 = vmatpush1.msra.mxu0 0.0
        %315 = vmatprep.subr.mxu0 0.0
        %316 = vmatpush1.msra.mxu0 0.0
        %317 = vmatprep.subr.mxu0 0.0
        %318 = vmatpush1.msra.mxu0 0.0
        %319 = vmatprep.subr.mxu0 0.0
        %320 = vmatpush1.msra.mxu0 0.0
        %321 = vmatprep.subr.mxu0 0.0
        %322 = vmatpush1.msra.mxu0 0.0
        %323 = vmatprep.subr.mxu0 0.0
        %324 = vmatpush1.msra.mxu0 0.0
        %325 = vmatprep.subr.mxu0 0.0
        %326 = vmatpush1.msra.mxu0 0.0
        %327 = vmatprep.subr.mxu0 0.0
        %328 = vmatpush1.msra.mxu0 0.0
        %329 = vmatprep.subr.mxu0 0.0
        %330 = vmatpush1.msra.mxu0 0.0
        %331 = vmatprep.subr.mxu0 0.0
        %332 = vmatpush1.msra.mxu0 0.0
        %333 = vmatprep.subr.mxu0 0.0
        %334 = vmatpush1.msra.mxu0 0.0
        %335 = vmatprep.subr.mxu0 0.0
        %336 = vmatpush1.msra.mxu0 0.0
        %337 = vmatprep.subr.mxu0 0.0
        %338 = vmatpush1.msra.mxu0 0.0
        %339 = vmatprep.subr.mxu0 0.0
        %340 = vmatpush1.msra.mxu0 0.0
        %341 = vmatprep.subr.mxu0 0.0
        %342 = vmatpush1.msra.mxu0 0.0
        %343 = vmatprep.subr.mxu0 0.0
        %344 = vmatpush1.msra.mxu0 0.0
        %345 = vmatprep.subr.mxu0 0.0
        %346 = vmatpush1.msra.mxu0 0.0
        %347 = vmatprep.subr.mxu0 0.0
        %348 = vmatpush1.msra.mxu0 0.0
        %349 = vmatprep.mubr.f32.mxu0 0.0
        %350 = vmatmul.mubr.f32.gmra.mrb[0].mxu0 %v277
        %v351 = vpop.f32.mrb[0].mxu0
        %v352 = vadd.f32 %v273, %v351
        %v353 = vpop.f32.mrb[0].mxu0
        %354 = vmatprep.mubr.f32.mxu0 0.0
        %355 = vmatmul.mubr.f32.gmra.mrb[0].mxu0 %v280
        %v356 = vpop.f32.mrb[0].mxu0
        %v357 = vadd.f32 %v273, %v356
        %v358 = vpop.f32.mrb[0].mxu0
        %359 = vmatprep.mubr.f32.mxu0 0.0
        %360 = vmatmul.mubr.f32.gmra.mrb[0].mxu0 %v283
        %v361 = vpop.f32.mrb[0].mxu0
        %v362 = vadd.f32 %v273, %v361
        %v363 = vpop.f32.mrb[0].mxu0
        %364 = vdwg.mxu0
        %v365 = vmul.f32 %v352, 0.35355338
        %367 = vrot.lane.b32.xlu0 %v365, 120
        %v368 = vpop.permute.xlu0 %367
        %369 = vrot.lane.b32.xlu0 %v365, 112
        %v370 = vpop.permute.xlu0 %369
        %371 = vrot.lane.b32.xlu0 %v365, 104
        %v372 = vpop.permute.xlu0 %371
        %374 = vrot.lane.b32.xlu0 %v357, 120
        %v375 = vpop.permute.xlu0 %374
        %376 = vrot.lane.b32.xlu0 %v357, 112
        %v377 = vpop.permute.xlu0 %376
        %378 = vrot.lane.b32.xlu0 %v357, 104
        %v379 = vpop.permute.xlu0 %378
        %381 = vrot.lane.b32.xlu0 %v362, 120
        %v382 = vpop.permute.xlu0 %381
        %383 = vrot.lane.b32.xlu0 %v362, 112
        %v384 = vpop.permute.xlu0 %383
        %385 = vrot.lane.b32.xlu0 %v362, 104
        %v386 = vpop.permute.xlu0 %385
        %387 = vrot.lane.b32.xlu0 %v357, 96
        %v388 = vpop.permute.xlu0 %387
        %vm389 = vcmask 64512
        %v390 = vsel %vm389, %v365, 0
        %v392 = vsel %vm389, %v388, 0
        %394 = vmatprep.subr.mxu0 0.0
        %395 = vmatpush1.xpose.msra.mxu0 %v392
        %396 = vmatprep.subr.mxu0 0.0
        %397 = vmatpush1.xpose.msra.mxu0 0.0
        %398 = vmatprep.subr.mxu0 0.0
        %399 = vmatpush1.xpose.msra.mxu0 0.0
        %400 = vmatprep.subr.mxu0 0.0
        %401 = vmatpush1.xpose.msra.mxu0 0.0
        %402 = vmatprep.subr.mxu0 0.0
        %403 = vmatpush1.xpose.msra.mxu0 0.0
        %404 = vmatprep.subr.mxu0 0.0
        %405 = vmatpush1.xpose.msra.mxu0 0.0
        %406 = vmatprep.subr.mxu0 0.0
        %407 = vmatpush1.xpose.msra.mxu0 0.0
        %408 = vmatprep.subr.mxu0 0.0
        %409 = vmatpush1.xpose.msra.mxu0 0.0
        %410 = vmatprep.subr.mxu0 0.0
        %411 = vmatpush1.xpose.msra.mxu0 0.0
        %412 = vmatprep.subr.mxu0 0.0
        %413 = vmatpush1.xpose.msra.mxu0 0.0
        %414 = vmatprep.subr.mxu0 0.0
        %415 = vmatpush1.xpose.msra.mxu0 0.0
        %416 = vmatprep.subr.mxu0 0.0
        %417 = vmatpush1.xpose.msra.mxu0 0.0
        %418 = vmatprep.subr.mxu0 0.0
        %419 = vmatpush1.xpose.msra.mxu0 0.0
        %420 = vmatprep.subr.mxu0 0.0
        %421 = vmatpush1.xpose.msra.mxu0 0.0
        %422 = vmatprep.subr.mxu0 0.0
        %423 = vmatpush1.xpose.msra.mxu0 0.0
        %424 = vmatprep.subr.mxu0 0.0
        %425 = vmatpush1.xpose.msra.mxu0 0.0
        %426 = vmatprep.subr.mxu0 0.0
        %427 = vmatpush1.xpose.msra.mxu0 0.0
        %428 = vmatprep.subr.mxu0 0.0
        %429 = vmatpush1.xpose.msra.mxu0 0.0
        %430 = vmatprep.subr.mxu0 0.0
        %431 = vmatpush1.xpose.msra.mxu0 0.0
        %432 = vmatprep.subr.mxu0 0.0
        %433 = vmatpush1.xpose.msra.mxu0 0.0
        %434 = vmatprep.subr.mxu0 0.0
        %435 = vmatpush1.xpose.msra.mxu0 0.0
        %436 = vmatprep.subr.mxu0 0.0
        %437 = vmatpush1.xpose.msra.mxu0 0.0
        %438 = vmatprep.subr.mxu0 0.0
        %439 = vmatpush1.xpose.msra.mxu0 0.0
        %440 = vmatprep.subr.mxu0 0.0
        %441 = vmatpush1.xpose.msra.mxu0 0.0
        %442 = vmatprep.subr.mxu0 0.0
        %443 = vmatpush1.xpose.msra.mxu0 0.0
        %444 = vmatprep.subr.mxu0 0.0
        %445 = vmatpush1.xpose.msra.mxu0 0.0
        %446 = vmatprep.subr.mxu0 0.0
        %447 = vmatpush1.xpose.msra.mxu0 0.0
        %448 = vmatprep.subr.mxu0 0.0
        %449 = vmatpush1.xpose.msra.mxu0 0.0
        %450 = vmatprep.subr.mxu0 0.0
        %451 = vmatpush1.xpose.msra.mxu0 0.0
        %452 = vmatprep.subr.mxu0 0.0
        %453 = vmatpush1.xpose.msra.mxu0 0.0
        %454 = vmatprep.subr.mxu0 0.0
        %455 = vmatpush1.xpose.msra.mxu0 0.0
        %456 = vmatprep.subr.mxu0 0.0
        %457 = vmatpush1.xpose.msra.mxu0 0.0
        %458 = vmatprep.mubr.f32.mxu0 0.0
        %459 = vmatmul.mubr.f32.gmra.mrb[0].mxu0 %v390
        %v460 = vpop.f32.mrb[0].mxu0
        %v461 = vadd.f32 0.0, %v460
        %v462 = vpop.f32.mrb[0].mxu0
        %463 = vdwg.mxu0
        %464 = vrot.lane.b32.xlu0 %v375, 96
        %v465 = vpop.permute.xlu0 %464
        %v466 = vsel %vm389, %v368, 0
        %v468 = vsel %vm389, %v465, 0
        %470 = vmatprep.subr.mxu0 0.0
        %471 = vmatpush1.xpose.msra.mxu0 %v468
        %472 = vmatprep.subr.mxu0 0.0
        %473 = vmatpush1.xpose.msra.mxu0 0.0
        %474 = vmatprep.subr.mxu0 0.0
        %475 = vmatpush1.xpose.msra.mxu0 0.0
        %476 = vmatprep.subr.mxu0 0.0
        %477 = vmatpush1.xpose.msra.mxu0 0.0
        %478 = vmatprep.subr.mxu0 0.0
        %479 = vmatpush1.xpose.msra.mxu0 0.0
        %480 = vmatprep.subr.mxu0 0.0
        %481 = vmatpush1.xpose.msra.mxu0 0.0
        %482 = vmatprep.subr.mxu0 0.0
        %483 = vmatpush1.xpose.msra.mxu0 0.0
        %484 = vmatprep.subr.mxu0 0.0
        %485 = vmatpush1.xpose.msra.mxu0 0.0
        %486 = vmatprep.subr.mxu0 0.0
        %487 = vmatpush1.xpose.msra.mxu0 0.0
        %488 = vmatprep.subr.mxu0 0.0
        %489 = vmatpush1.xpose.msra.mxu0 0.0
        %490 = vmatprep.subr.mxu0 0.0
        %491 = vmatpush1.xpose.msra.mxu0 0.0
        %492 = vmatprep.subr.mxu0 0.0
        %493 = vmatpush1.xpose.msra.mxu0 0.0
        %494 = vmatprep.subr.mxu0 0.0
        %495 = vmatpush1.xpose.msra.mxu0 0.0
        %496 = vmatprep.subr.mxu0 0.0
        %497 = vmatpush1.xpose.msra.mxu0 0.0
        %498 = vmatprep.subr.mxu0 0.0
        %499 = vmatpush1.xpose.msra.mxu0 0.0
        %500 = vmatprep.subr.mxu0 0.0
        %501 = vmatpush1.xpose.msra.mxu0 0.0
        %502 = vmatprep.subr.mxu0 0.0
        %503 = vmatpush1.xpose.msra.mxu0 0.0
        %504 = vmatprep.subr.mxu0 0.0
        %505 = vmatpush1.xpose.msra.mxu0 0.0
        %506 = vmatprep.subr.mxu0 0.0
        %507 = vmatpush1.xpose.msra.mxu0 0.0
        %508 = vmatprep.subr.mxu0 0.0
        %509 = vmatpush1.xpose.msra.mxu0 0.0
        %510 = vmatprep.subr.mxu0 0.0
        %511 = vmatpush1.xpose.msra.mxu0 0.0
        %512 = vmatprep.subr.mxu0 0.0
        %513 = vmatpush1.xpose.msra.mxu0 0.0
        %514 = vmatprep.subr.mxu0 0.0
        %515 = vmatpush1.xpose.msra.mxu0 0.0
        %516 = vmatprep.subr.mxu0 0.0
        %517 = vmatpush1.xpose.msra.mxu0 0.0
        %518 = vmatprep.subr.mxu0 0.0
        %519 = vmatpush1.xpose.msra.mxu0 0.0
        %520 = vmatprep.subr.mxu0 0.0
        %521 = vmatpush1.xpose.msra.mxu0 0.0
        %522 = vmatprep.subr.mxu0 0.0
        %523 = vmatpush1.xpose.msra.mxu0 0.0
        %524 = vmatprep.subr.mxu0 0.0
        %525 = vmatpush1.xpose.msra.mxu0 0.0
        %526 = vmatprep.subr.mxu0 0.0
        %527 = vmatpush1.xpose.msra.mxu0 0.0
        %528 = vmatprep.subr.mxu0 0.0
        %529 = vmatpush1.xpose.msra.mxu0 0.0
        %530 = vmatprep.subr.mxu0 0.0
        %531 = vmatpush1.xpose.msra.mxu0 0.0
        %532 = vmatprep.subr.mxu0 0.0
        %533 = vmatpush1.xpose.msra.mxu0 0.0
        %534 = vmatprep.mubr.f32.mxu0 0.0
        %535 = vmatmul.mubr.f32.gmra.mrb[0].mxu0 %v466
        %v536 = vpop.f32.mrb[0].mxu0
        %v537 = vadd.f32 0.0, %v536
        %v538 = vpop.f32.mrb[0].mxu0
        %539 = vdwg.mxu0
        %540 = vrot.lane.b32.xlu0 %v377, 96
        %v541 = vpop.permute.xlu0 %540
        %v542 = vsel %vm389, %v370, 0
        %v544 = vsel %vm389, %v541, 0
        %546 = vmatprep.subr.mxu0 0.0
        %547 = vmatpush1.xpose.msra.mxu0 %v544
        %548 = vmatprep.subr.mxu0 0.0
        %549 = vmatpush1.xpose.msra.mxu0 0.0
        %550 = vmatprep.subr.mxu0 0.0
        %551 = vmatpush1.xpose.msra.mxu0 0.0
        %552 = vmatprep.subr.mxu0 0.0
        %553 = vmatpush1.xpose.msra.mxu0 0.0
        %554 = vmatprep.subr.mxu0 0.0
        %555 = vmatpush1.xpose.msra.mxu0 0.0
        %556 = vmatprep.subr.mxu0 0.0
        %557 = vmatpush1.xpose.msra.mxu0 0.0
        %558 = vmatprep.subr.mxu0 0.0
        %559 = vmatpush1.xpose.msra.mxu0 0.0
        %560 = vmatprep.subr.mxu0 0.0
        %561 = vmatpush1.xpose.msra.mxu0 0.0
        %562 = vmatprep.subr.mxu0 0.0
        %563 = vmatpush1.xpose.msra.mxu0 0.0
        %564 = vmatprep.subr.mxu0 0.0
        %565 = vmatpush1.xpose.msra.mxu0 0.0
        %566 = vmatprep.subr.mxu0 0.0
        %567 = vmatpush1.xpose.msra.mxu0 0.0
        %568 = vmatprep.subr.mxu0 0.0
        %569 = vmatpush1.xpose.msra.mxu0 0.0
        %570 = vmatprep.subr.mxu0 0.0
        %571 = vmatpush1.xpose.msra.mxu0 0.0
        %572 = vmatprep.subr.mxu0 0.0
        %573 = vmatpush1.xpose.msra.mxu0 0.0
        %574 = vmatprep.subr.mxu0 0.0
        %575 = vmatpush1.xpose.msra.mxu0 0.0
        %576 = vmatprep.subr.mxu0 0.0
        %577 = vmatpush1.xpose.msra.mxu0 0.0
        %578 = vmatprep.subr.mxu0 0.0
        %579 = vmatpush1.xpose.msra.mxu0 0.0
        %580 = vmatprep.subr.mxu0 0.0
        %581 = vmatpush1.xpose.msra.mxu0 0.0
        %582 = vmatprep.subr.mxu0 0.0
        %583 = vmatpush1.xpose.msra.mxu0 0.0
        %584 = vmatprep.subr.mxu0 0.0
        %585 = vmatpush1.xpose.msra.mxu0 0.0
        %586 = vmatprep.subr.mxu0 0.0
        %587 = vmatpush1.xpose.msra.mxu0 0.0
        %588 = vmatprep.subr.mxu0 0.0
        %589 = vmatpush1.xpose.msra.mxu0 0.0
        %590 = vmatprep.subr.mxu0 0.0
        %591 = vmatpush1.xpose.msra.mxu0 0.0
        %592 = vmatprep.subr.mxu0 0.0
        %593 = vmatpush1.xpose.msra.mxu0 0.0
        %594 = vmatprep.subr.mxu0 0.0
        %595 = vmatpush1.xpose.msra.mxu0 0.0
        %596 = vmatprep.subr.mxu0 0.0
        %597 = vmatpush1.xpose.msra.mxu0 0.0
        %598 = vmatprep.subr.mxu0 0.0
        %599 = vmatpush1.xpose.msra.mxu0 0.0
        %600 = vmatprep.subr.mxu0 0.0
        %601 = vmatpush1.xpose.msra.mxu0 0.0
        %602 = vmatprep.subr.mxu0 0.0
        %603 = vmatpush1.xpose.msra.mxu0 0.0
        %604 = vmatprep.subr.mxu0 0.0
        %605 = vmatpush1.xpose.msra.mxu0 0.0
        %606 = vmatprep.subr.mxu0 0.0
        %607 = vmatpush1.xpose.msra.mxu0 0.0
        %608 = vmatprep.subr.mxu0 0.0
        %609 = vmatpush1.xpose.msra.mxu0 0.0
        %610 = vmatprep.mubr.f32.mxu0 0.0
        %611 = vmatmul.mubr.f32.gmra.mrb[0].mxu0 %v542
        %v612 = vpop.f32.mrb[0].mxu0
        %v613 = vadd.f32 0.0, %v612
        %v614 = vpop.f32.mrb[0].mxu0
        %615 = vdwg.mxu0
        %616 = vrot.lane.b32.xlu0 %v379, 96
        %v617 = vpop.permute.xlu0 %616
        %v618 = vsel %vm389, %v372, 0
        %v620 = vsel %vm389, %v617, 0
        %622 = vmatprep.subr.mxu0 0.0
        %623 = vmatpush1.xpose.msra.mxu0 %v620
        %624 = vmatprep.subr.mxu0 0.0
        %625 = vmatpush1.xpose.msra.mxu0 0.0
        %626 = vmatprep.subr.mxu0 0.0
        %627 = vmatpush1.xpose.msra.mxu0 0.0
        %628 = vmatprep.subr.mxu0 0.0
        %629 = vmatpush1.xpose.msra.mxu0 0.0
        %630 = vmatprep.subr.mxu0 0.0
        %631 = vmatpush1.xpose.msra.mxu0 0.0
        %632 = vmatprep.subr.mxu0 0.0
        %633 = vmatpush1.xpose.msra.mxu0 0.0
        %634 = vmatprep.subr.mxu0 0.0
        %635 = vmatpush1.xpose.msra.mxu0 0.0
        %636 = vmatprep.subr.mxu0 0.0
        %637 = vmatpush1.xpose.msra.mxu0 0.0
        %638 = vmatprep.subr.mxu0 0.0
        %639 = vmatpush1.xpose.msra.mxu0 0.0
        %640 = vmatprep.subr.mxu0 0.0
        %641 = vmatpush1.xpose.msra.mxu0 0.0
        %642 = vmatprep.subr.mxu0 0.0
        %643 = vmatpush1.xpose.msra.mxu0 0.0
        %644 = vmatprep.subr.mxu0 0.0
        %645 = vmatpush1.xpose.msra.mxu0 0.0
        %646 = vmatprep.subr.mxu0 0.0
        %647 = vmatpush1.xpose.msra.mxu0 0.0
        %648 = vmatprep.subr.mxu0 0.0
        %649 = vmatpush1.xpose.msra.mxu0 0.0
        %650 = vmatprep.subr.mxu0 0.0
        %651 = vmatpush1.xpose.msra.mxu0 0.0
        %652 = vmatprep.subr.mxu0 0.0
        %653 = vmatpush1.xpose.msra.mxu0 0.0
        %654 = vmatprep.subr.mxu0 0.0
        %655 = vmatpush1.xpose.msra.mxu0 0.0
        %656 = vmatprep.subr.mxu0 0.0
        %657 = vmatpush1.xpose.msra.mxu0 0.0
        %658 = vmatprep.subr.mxu0 0.0
        %659 = vmatpush1.xpose.msra.mxu0 0.0
        %660 = vmatprep.subr.mxu0 0.0
        %661 = vmatpush1.xpose.msra.mxu0 0.0
        %662 = vmatprep.subr.mxu0 0.0
        %663 = vmatpush1.xpose.msra.mxu0 0.0
        %664 = vmatprep.subr.mxu0 0.0
        %665 = vmatpush1.xpose.msra.mxu0 0.0
        %666 = vmatprep.subr.mxu0 0.0
        %667 = vmatpush1.xpose.msra.mxu0 0.0
        %668 = vmatprep.subr.mxu0 0.0
        %669 = vmatpush1.xpose.msra.mxu0 0.0
        %670 = vmatprep.subr.mxu0 0.0
        %671 = vmatpush1.xpose.msra.mxu0 0.0
        %672 = vmatprep.subr.mxu0 0.0
        %673 = vmatpush1.xpose.msra.mxu0 0.0
        %674 = vmatprep.subr.mxu0 0.0
        %675 = vmatpush1.xpose.msra.mxu0 0.0
        %676 = vmatprep.subr.mxu0 0.0
        %677 = vmatpush1.xpose.msra.mxu0 0.0
        %678 = vmatprep.subr.mxu0 0.0
        %679 = vmatpush1.xpose.msra.mxu0 0.0
        %680 = vmatprep.subr.mxu0 0.0
        %681 = vmatpush1.xpose.msra.mxu0 0.0
        %682 = vmatprep.subr.mxu0 0.0
        %683 = vmatpush1.xpose.msra.mxu0 0.0
        %684 = vmatprep.subr.mxu0 0.0
        %685 = vmatpush1.xpose.msra.mxu0 0.0
        %686 = vmatprep.mubr.f32.mxu0 0.0
        %687 = vmatmul.mubr.f32.gmra.mrb[0].mxu0 %v618
        %v688 = vpop.f32.mrb[0].mxu0
        %v689 = vadd.f32 0.0, %v688
        %v690 = vpop.f32.mrb[0].mxu0
        %691 = vdwg.mxu0
        %v692 = vsel %vm389, %v461, -inf
        %693 = vmax.xlane.f32.xlu0 %v692
        %v694 = vpop.xlane.xlu0 %693
        %v695 = vsel %vm389, %v537, -inf
        %696 = vmax.xlane.f32.xlu0 %v695
        %v697 = vpop.xlane.xlu0 %696
        %v698 = vsel %vm389, %v613, -inf
        %699 = vmax.xlane.f32.xlu0 %v698
        %v700 = vpop.xlane.xlu0 %699
        %v701 = vsel %vm389, %v689, -inf
        %702 = vmax.xlane.f32.xlu0 %v701
        %v703 = vpop.xlane.xlu0 %702
        %v704 = vsub.f32 %v461, %v694
        %v705 = vsub.f32 %v537, %v697
        %v706 = vsub.f32 %v613, %v700
        %v707 = vsub.f32 %v689, %v703
        %v708 = vmul.f32 %v704, 1.442695
        %v709 = vpow.pop %v708
        %v710 = vmul.f32 %v705, 1.442695
        %v711 = vpow.pop %v710
        %v712 = vmul.f32 %v706, 1.442695
        %v713 = vpow.pop %v712
        %v714 = vmul.f32 %v707, 1.442695
        %v715 = vpow.pop %v714
        %v716 = vsel %vm389, %v709, 0.0
        %717 = vadd.xlane.f32.xlu0 %v716
        %v718 = vpop.xlane.xlu0 %717
        %v719 = vsel %vm389, %v711, 0.0
        %720 = vadd.xlane.f32.xlu0 %v719
        %v721 = vpop.xlane.xlu0 %720
        %v722 = vsel %vm389, %v713, 0.0
        %723 = vadd.xlane.f32.xlu0 %v722
        %v724 = vpop.xlane.xlu0 %723
        %v725 = vsel %vm389, %v715, 0.0
        %726 = vadd.xlane.f32.xlu0 %v725
        %v727 = vpop.xlane.xlu0 %726
        %v728 = vrcp.pop %v718
        %v729 = vrcp.pop %v721
        %v730 = vrcp.pop %v724
        %v731 = vrcp.pop %v727
        %v732 = vmul.f32 %v709, %v728
        %v733 = vmul.f32 %v711, %v729
        %v734 = vmul.f32 %v713, %v730
        %v735 = vmul.f32 %v715, %v731
        %736 = vst.msk [vmem:[%s255] sm:$0xff] %vm389, %v732
        %737 = vst.msk [vmem:[%s255 + $0x8] sm:$0xff] %vm389, %v733
        %738 = vst.msk [vmem:[%s255 + $0x10] sm:$0xff] %vm389, %v734
        %739 = vst.msk [vmem:[%s255 + $0x18] sm:$0xff] %vm389, %v735
        %740 = vrot.lane.b32.xlu0 %v362, 64
        %v741 = vpop.permute.xlu0 %740
        %v744 = vsel %vm389, %v732, 0
        %746 = vmatprep.subr.mxu0 0.0
        %747 = vmatpush1.msra.mxu0 %v741
        %748 = vmatprep.subr.mxu0 0.0
        %749 = vmatpush1.msra.mxu0 0.0
        %750 = vmatprep.subr.mxu0 0.0
        %751 = vmatpush1.msra.mxu0 0.0
        %752 = vmatprep.subr.mxu0 0.0
        %753 = vmatpush1.msra.mxu0 0.0
        %754 = vmatprep.subr.mxu0 0.0
        %755 = vmatpush1.msra.mxu0 0.0
        %756 = vmatprep.subr.mxu0 0.0
        %757 = vmatpush1.msra.mxu0 0.0
        %758 = vmatprep.subr.mxu0 0.0
        %759 = vmatpush1.msra.mxu0 0.0
        %760 = vmatprep.subr.mxu0 0.0
        %761 = vmatpush1.msra.mxu0 0.0
        %762 = vmatprep.subr.mxu0 0.0
        %763 = vmatpush1.msra.mxu0 0.0
        %764 = vmatprep.subr.mxu0 0.0
        %765 = vmatpush1.msra.mxu0 0.0
        %766 = vmatprep.subr.mxu0 0.0
        %767 = vmatpush1.msra.mxu0 0.0
        %768 = vmatprep.subr.mxu0 0.0
        %769 = vmatpush1.msra.mxu0 0.0
        %770 = vmatprep.subr.mxu0 0.0
        %771 = vmatpush1.msra.mxu0 0.0
        %772 = vmatprep.subr.mxu0 0.0
        %773 = vmatpush1.msra.mxu0 0.0
        %774 = vmatprep.subr.mxu0 0.0
        %775 = vmatpush1.msra.mxu0 0.0
        %776 = vmatprep.subr.mxu0 0.0
        %777 = vmatpush1.msra.mxu0 0.0
        %778 = vmatprep.subr.mxu0 0.0
        %779 = vmatpush1.msra.mxu0 0.0
        %780 = vmatprep.subr.mxu0 0.0
        %781 = vmatpush1.msra.mxu0 0.0
        %782 = vmatprep.subr.mxu0 0.0
        %783 = vmatpush1.msra.mxu0 0.0
        %784 = vmatprep.subr.mxu0 0.0
        %785 = vmatpush1.msra.mxu0 0.0
        %786 = vmatprep.subr.mxu0 0.0
        %787 = vmatpush1.msra.mxu0 0.0
        %788 = vmatprep.subr.mxu0 0.0
        %789 = vmatpush1.msra.mxu0 0.0
        %790 = vmatprep.subr.mxu0 0.0
        %791 = vmatpush1.msra.mxu0 0.0
        %792 = vmatprep.subr.mxu0 0.0
        %793 = vmatpush1.msra.mxu0 0.0
        %794 = vmatprep.subr.mxu0 0.0
        %795 = vmatpush1.msra.mxu0 0.0
        %796 = vmatprep.subr.mxu0 0.0
        %797 = vmatpush1.msra.mxu0 0.0
        %798 = vmatprep.subr.mxu0 0.0
        %799 = vmatpush1.msra.mxu0 0.0
        %800 = vmatprep.subr.mxu0 0.0
        %801 = vmatpush1.msra.mxu0 0.0
        %802 = vmatprep.subr.mxu0 0.0
        %803 = vmatpush1.msra.mxu0 0.0
        %804 = vmatprep.subr.mxu0 0.0
        %805 = vmatpush1.msra.mxu0 0.0
        %806 = vmatprep.subr.mxu0 0.0
        %807 = vmatpush1.msra.mxu0 0.0
        %808 = vmatprep.subr.mxu0 0.0
        %809 = vmatpush1.msra.mxu0 0.0
        %810 = vmatprep.mubr.f32.mxu0 0.0
        %811 = vmatmul.mubr.f32.gmra.mrb[0].mxu0 %v744
        %v812 = vpop.f32.mrb[0].mxu0
        %v813 = vadd.f32 0.0, %v812
        %v814 = vpop.f32.mrb[0].mxu0
        %815 = vdwg.mxu0
        %816 = vrot.lane.b32.xlu0 %v382, 64
        %v817 = vpop.permute.xlu0 %816
        %v820 = vsel %vm389, %v733, 0
        %822 = vmatprep.subr.mxu0 0.0
        %823 = vmatpush1.msra.mxu0 %v817
        %824 = vmatprep.subr.mxu0 0.0
        %825 = vmatpush1.msra.mxu0 0.0
        %826 = vmatprep.subr.mxu0 0.0
        %827 = vmatpush1.msra.mxu0 0.0
        %828 = vmatprep.subr.mxu0 0.0
        %829 = vmatpush1.msra.mxu0 0.0
        %830 = vmatprep.subr.mxu0 0.0
        %831 = vmatpush1.msra.mxu0 0.0
        %832 = vmatprep.subr.mxu0 0.0
        %833 = vmatpush1.msra.mxu0 0.0
        %834 = vmatprep.subr.mxu0 0.0
        %835 = vmatpush1.msra.mxu0 0.0
        %836 = vmatprep.subr.mxu0 0.0
        %837 = vmatpush1.msra.mxu0 0.0
        %838 = vmatprep.subr.mxu0 0.0
        %839 = vmatpush1.msra.mxu0 0.0
        %840 = vmatprep.subr.mxu0 0.0
        %841 = vmatpush1.msra.mxu0 0.0
        %842 = vmatprep.subr.mxu0 0.0
        %843 = vmatpush1.msra.mxu0 0.0
        %844 = vmatprep.subr.mxu0 0.0
        %845 = vmatpush1.msra.mxu0 0.0
        %846 = vmatprep.subr.mxu0 0.0
        %847 = vmatpush1.msra.mxu0 0.0
        %848 = vmatprep.subr.mxu0 0.0
        %849 = vmatpush1.msra.mxu0 0.0
        %850 = vmatprep.subr.mxu0 0.0
        %851 = vmatpush1.msra.mxu0 0.0
        %852 = vmatprep.subr.mxu0 0.0
        %853 = vmatpush1.msra.mxu0 0.0
        %854 = vmatprep.subr.mxu0 0.0
        %855 = vmatpush1.msra.mxu0 0.0
        %856 = vmatprep.subr.mxu0 0.0
        %857 = vmatpush1.msra.mxu0 0.0
        %858 = vmatprep.subr.mxu0 0.0
        %859 = vmatpush1.msra.mxu0 0.0
        %860 = vmatprep.subr.mxu0 0.0
        %861 = vmatpush1.msra.mxu0 0.0
        %862 = vmatprep.subr.mxu0 0.0
        %863 = vmatpush1.msra.mxu0 0.0
        %864 = vmatprep.subr.mxu0 0.0
        %865 = vmatpush1.msra.mxu0 0.0
        %866 = vmatprep.subr.mxu0 0.0
        %867 = vmatpush1.msra.mxu0 0.0
        %868 = vmatprep.subr.mxu0 0.0
        %869 = vmatpush1.msra.mxu0 0.0
        %870 = vmatprep.subr.mxu0 0.0
        %871 = vmatpush1.msra.mxu0 0.0
        %872 = vmatprep.subr.mxu0 0.0
        %873 = vmatpush1.msra.mxu0 0.0
        %874 = vmatprep.subr.mxu0 0.0
        %875 = vmatpush1.msra.mxu0 0.0
        %876 = vmatprep.subr.mxu0 0.0
        %877 = vmatpush1.msra.mxu0 0.0
        %878 = vmatprep.subr.mxu0 0.0
        %879 = vmatpush1.msra.mxu0 0.0
        %880 = vmatprep.subr.mxu0 0.0
        %881 = vmatpush1.msra.mxu0 0.0
        %882 = vmatprep.subr.mxu0 0.0
        %883 = vmatpush1.msra.mxu0 0.0
        %884 = vmatprep.subr.mxu0 0.0
        %885 = vmatpush1.msra.mxu0 0.0
        %886 = vmatprep.mubr.f32.mxu0 0.0
        %887 = vmatmul.mubr.f32.gmra.mrb[0].mxu0 %v820
        %v888 = vpop.f32.mrb[0].mxu0
        %v889 = vadd.f32 0.0, %v888
        %v890 = vpop.f32.mrb[0].mxu0
        %891 = vdwg.mxu0
        %892 = vrot.lane.b32.xlu0 %v384, 64
        %v893 = vpop.permute.xlu0 %892
        %v896 = vsel %vm389, %v734, 0
        %898 = vmatprep.subr.mxu0 0.0
        %899 = vmatpush1.msra.mxu0 %v893
        %900 = vmatprep.subr.mxu0 0.0
        %901 = vmatpush1.msra.mxu0 0.0
        %902 = vmatprep.subr.mxu0 0.0
        %903 = vmatpush1.msra.mxu0 0.0
        %904 = vmatprep.subr.mxu0 0.0
        %905 = vmatpush1.msra.mxu0 0.0
        %906 = vmatprep.subr.mxu0 0.0
        %907 = vmatpush1.msra.mxu0 0.0
        %908 = vmatprep.subr.mxu0 0.0
        %909 = vmatpush1.msra.mxu0 0.0
        %910 = vmatprep.subr.mxu0 0.0
        %911 = vmatpush1.msra.mxu0 0.0
        %912 = vmatprep.subr.mxu0 0.0
        %913 = vmatpush1.msra.mxu0 0.0
        %914 = vmatprep.subr.mxu0 0.0
        %915 = vmatpush1.msra.mxu0 0.0
        %916 = vmatprep.subr.mxu0 0.0
        %917 = vmatpush1.msra.mxu0 0.0
        %918 = vmatprep.subr.mxu0 0.0
        %919 = vmatpush1.msra.mxu0 0.0
        %920 = vmatprep.subr.mxu0 0.0
        %921 = vmatpush1.msra.mxu0 0.0
        %922 = vmatprep.subr.mxu0 0.0
        %923 = vmatpush1.msra.mxu0 0.0
        %924 = vmatprep.subr.mxu0 0.0
        %925 = vmatpush1.msra.mxu0 0.0
        %926 = vmatprep.subr.mxu0 0.0
        %927 = vmatpush1.msra.mxu0 0.0
        %928 = vmatprep.subr.mxu0 0.0
        %929 = vmatpush1.msra.mxu0 0.0
        %930 = vmatprep.subr.mxu0 0.0
        %931 = vmatpush1.msra.mxu0 0.0
        %932 = vmatprep.subr.mxu0 0.0
        %933 = vmatpush1.msra.mxu0 0.0
        %934 = vmatprep.subr.mxu0 0.0
        %935 = vmatpush1.msra.mxu0 0.0
        %936 = vmatprep.subr.mxu0 0.0
        %937 = vmatpush1.msra.mxu0 0.0
        %938 = vmatprep.subr.mxu0 0.0
        %939 = vmatpush1.msra.mxu0 0.0
        %940 = vmatprep.subr.mxu0 0.0
        %941 = vmatpush1.msra.mxu0 0.0
        %942 = vmatprep.subr.mxu0 0.0
        %943 = vmatpush1.msra.mxu0 0.0
        %944 = vmatprep.subr.mxu0 0.0
        %945 = vmatpush1.msra.mxu0 0.0
        %946 = vmatprep.subr.mxu0 0.0
        %947 = vmatpush1.msra.mxu0 0.0
        %948 = vmatprep.subr.mxu0 0.0
        %949 = vmatpush1.msra.mxu0 0.0
        %950 = vmatprep.subr.mxu0 0.0
        %951 = vmatpush1.msra.mxu0 0.0
        %952 = vmatprep.subr.mxu0 0.0
        %953 = vmatpush1.msra.mxu0 0.0
        %954 = vmatprep.subr.mxu0 0.0
        %955 = vmatpush1.msra.mxu0 0.0
        %956 = vmatprep.subr.mxu0 0.0
        %957 = vmatpush1.msra.mxu0 0.0
        %958 = vmatprep.subr.mxu0 0.0
        %959 = vmatpush1.msra.mxu0 0.0
        %960 = vmatprep.subr.mxu0 0.0
        %961 = vmatpush1.msra.mxu0 0.0
        %962 = vmatprep.mubr.f32.mxu0 0.0
        %963 = vmatmul.mubr.f32.gmra.mrb[0].mxu0 %v896
        %v964 = vpop.f32.mrb[0].mxu0
        %v965 = vadd.f32 0.0, %v964
        %v966 = vpop.f32.mrb[0].mxu0
        %967 = vdwg.mxu0
        %968 = vrot.lane.b32.xlu0 %v386, 64
        %v969 = vpop.permute.xlu0 %968
        %v972 = vsel %vm389, %v735, 0
        %974 = vmatprep.subr.mxu0 0.0
        %975 = vmatpush1.msra.mxu0 %v969
        %976 = vmatprep.subr.mxu0 0.0
        %977 = vmatpush1.msra.mxu0 0.0
        %978 = vmatprep.subr.mxu0 0.0
        %979 = vmatpush1.msra.mxu0 0.0
        %980 = vmatprep.subr.mxu0 0.0
        %981 = vmatpush1.msra.mxu0 0.0
        %982 = vmatprep.subr.mxu0 0.0
        %983 = vmatpush1.msra.mxu0 0.0
        %984 = vmatprep.subr.mxu0 0.0
        %985 = vmatpush1.msra.mxu0 0.0
        %986 = vmatprep.subr.mxu0 0.0
        %987 = vmatpush1.msra.mxu0 0.0
        %988 = vmatprep.subr.mxu0 0.0
        %989 = vmatpush1.msra.mxu0 0.0
        %990 = vmatprep.subr.mxu0 0.0
        %991 = vmatpush1.msra.mxu0 0.0
        %992 = vmatprep.subr.mxu0 0.0
        %993 = vmatpush1.msra.mxu0 0.0
        %994 = vmatprep.subr.mxu0 0.0
        %995 = vmatpush1.msra.mxu0 0.0
        %996 = vmatprep.subr.mxu0 0.0
        %997 = vmatpush1.msra.mxu0 0.0
        %998 = vmatprep.subr.mxu0 0.0
        %999 = vmatpush1.msra.mxu0 0.0
        %1000 = vmatprep.subr.mxu0 0.0
        %1001 = vmatpush1.msra.mxu0 0.0
        %1002 = vmatprep.subr.mxu0 0.0
        %1003 = vmatpush1.msra.mxu0 0.0
        %1004 = vmatprep.subr.mxu0 0.0
        %1005 = vmatpush1.msra.mxu0 0.0
        %1006 = vmatprep.subr.mxu0 0.0
        %1007 = vmatpush1.msra.mxu0 0.0
        %1008 = vmatprep.subr.mxu0 0.0
        %1009 = vmatpush1.msra.mxu0 0.0
        %1010 = vmatprep.subr.mxu0 0.0
        %1011 = vmatpush1.msra.mxu0 0.0
        %1012 = vmatprep.subr.mxu0 0.0
        %1013 = vmatpush1.msra.mxu0 0.0
        %1014 = vmatprep.subr.mxu0 0.0
        %1015 = vmatpush1.msra.mxu0 0.0
        %1016 = vmatprep.subr.mxu0 0.0
        %1017 = vmatpush1.msra.mxu0 0.0
        %1018 = vmatprep.subr.mxu0 0.0
        %1019 = vmatpush1.msra.mxu0 0.0
        %1020 = vmatprep.subr.mxu0 0.0
        %1021 = vmatpush1.msra.mxu0 0.0
        %1022 = vmatprep.subr.mxu0 0.0
        %1023 = vmatpush1.msra.mxu0 0.0
        %1024 = vmatprep.subr.mxu0 0.0
        %1025 = vmatpush1.msra.mxu0 0.0
        %1026 = vmatprep.subr.mxu0 0.0
        %1027 = vmatpush1.msra.mxu0 0.0
        %1028 = vmatprep.subr.mxu0 0.0
        %1029 = vmatpush1.msra.mxu0 0.0
        %1030 = vmatprep.subr.mxu0 0.0
        %1031 = vmatpush1.msra.mxu0 0.0
        %1032 = vmatprep.subr.mxu0 0.0
        %1033 = vmatpush1.msra.mxu0 0.0
        %1034 = vmatprep.subr.mxu0 0.0
        %1035 = vmatpush1.msra.mxu0 0.0
        %1036 = vmatprep.subr.mxu0 0.0
        %1037 = vmatpush1.msra.mxu0 0.0
        %1038 = vmatprep.mubr.f32.mxu0 0.0
        %1039 = vmatmul.mubr.f32.gmra.mrb[0].mxu0 %v972
        %v1040 = vpop.f32.mrb[0].mxu0
        %v1041 = vadd.f32 0.0, %v1040
        %v1042 = vpop.f32.mrb[0].mxu0
        %1043 = vdwg.mxu0
        %v1044 = vld [vmem:[%s3] sm:$0xff]
        %v1045 = vld [vmem:[%s3 + $0x8] sm:$0xff]
        %v1046 = vld [vmem:[%s3 + $0x10] sm:$0xff]
        %v1047 = vld [vmem:[%s3 + $0x18] sm:$0xff]
        %v1049 = vsel %vm389, %v813, 0
        %1051 = vmatprep.subr.mxu0 0.0
        %1052 = vmatpush1.msra.mxu0 %v1044
        %1053 = vmatprep.subr.mxu0 0.0
        %1054 = vmatpush1.msra.mxu0 0.0
        %1055 = vmatprep.subr.mxu0 0.0
        %1056 = vmatpush1.msra.mxu0 0.0
        %1057 = vmatprep.subr.mxu0 0.0
        %1058 = vmatpush1.msra.mxu0 0.0
        %1059 = vmatprep.subr.mxu0 0.0
        %1060 = vmatpush1.msra.mxu0 0.0
        %1061 = vmatprep.subr.mxu0 0.0
        %1062 = vmatpush1.msra.mxu0 0.0
        %1063 = vmatprep.subr.mxu0 0.0
        %1064 = vmatpush1.msra.mxu0 0.0
        %1065 = vmatprep.subr.mxu0 0.0
        %1066 = vmatpush1.msra.mxu0 0.0
        %1067 = vmatprep.subr.mxu0 0.0
        %1068 = vmatpush1.msra.mxu0 0.0
        %1069 = vmatprep.subr.mxu0 0.0
        %1070 = vmatpush1.msra.mxu0 0.0
        %1071 = vmatprep.subr.mxu0 0.0
        %1072 = vmatpush1.msra.mxu0 0.0
        %1073 = vmatprep.subr.mxu0 0.0
        %1074 = vmatpush1.msra.mxu0 0.0
        %1075 = vmatprep.subr.mxu0 0.0
        %1076 = vmatpush1.msra.mxu0 0.0
        %1077 = vmatprep.subr.mxu0 0.0
        %1078 = vmatpush1.msra.mxu0 0.0
        %1079 = vmatprep.subr.mxu0 0.0
        %1080 = vmatpush1.msra.mxu0 0.0
        %1081 = vmatprep.subr.mxu0 0.0
        %1082 = vmatpush1.msra.mxu0 0.0
        %1083 = vmatprep.subr.mxu0 0.0
        %1084 = vmatpush1.msra.mxu0 0.0
        %1085 = vmatprep.subr.mxu0 0.0
        %1086 = vmatpush1.msra.mxu0 0.0
        %1087 = vmatprep.subr.mxu0 0.0
        %1088 = vmatpush1.msra.mxu0 0.0
        %1089 = vmatprep.subr.mxu0 0.0
        %1090 = vmatpush1.msra.mxu0 0.0
        %1091 = vmatprep.subr.mxu0 0.0
        %1092 = vmatpush1.msra.mxu0 0.0
        %1093 = vmatprep.subr.mxu0 0.0
        %1094 = vmatpush1.msra.mxu0 0.0
        %1095 = vmatprep.subr.mxu0 0.0
        %1096 = vmatpush1.msra.mxu0 0.0
        %1097 = vmatprep.subr.mxu0 0.0
        %1098 = vmatpush1.msra.mxu0 0.0
        %1099 = vmatprep.subr.mxu0 0.0
        %1100 = vmatpush1.msra.mxu0 0.0
        %1101 = vmatprep.subr.mxu0 0.0
        %1102 = vmatpush1.msra.mxu0 0.0
        %1103 = vmatprep.subr.mxu0 0.0
        %1104 = vmatpush1.msra.mxu0 0.0
        %1105 = vmatprep.subr.mxu0 0.0
        %1106 = vmatpush1.msra.mxu0 0.0
        %1107 = vmatprep.subr.mxu0 0.0
        %1108 = vmatpush1.msra.mxu0 0.0
        %1109 = vmatprep.subr.mxu0 0.0
        %1110 = vmatpush1.msra.mxu0 0.0
        %1111 = vmatprep.subr.mxu0 0.0
        %1112 = vmatpush1.msra.mxu0 0.0
        %1113 = vmatprep.subr.mxu0 0.0
        %1114 = vmatpush1.msra.mxu0 0.0
        %1115 = vmatprep.mubr.f32.mxu0 0.0
        %1116 = vmatmul.mubr.f32.gmra.mrb[0].mxu0 %v1049
        %v1117 = vpop.f32.mrb[0].mxu0
        %v1118 = vadd.f32 0.0, %v1117
        %v1119 = vpop.f32.mrb[0].mxu0
        %1120 = vdwg.mxu0
        %v1122 = vsel %vm389, %v889, 0
        %1124 = vmatprep.subr.mxu0 0.0
        %1125 = vmatpush1.msra.mxu0 %v1045
        %1126 = vmatprep.subr.mxu0 0.0
        %1127 = vmatpush1.msra.mxu0 0.0
        %1128 = vmatprep.subr.mxu0 0.0
        %1129 = vmatpush1.msra.mxu0 0.0
        %1130 = vmatprep.subr.mxu0 0.0
        %1131 = vmatpush1.msra.mxu0 0.0
        %1132 = vmatprep.subr.mxu0 0.0
        %1133 = vmatpush1.msra.mxu0 0.0
        %1134 = vmatprep.subr.mxu0 0.0
        %1135 = vmatpush1.msra.mxu0 0.0
        %1136 = vmatprep.subr.mxu0 0.0
        %1137 = vmatpush1.msra.mxu0 0.0
        %1138 = vmatprep.subr.mxu0 0.0
        %1139 = vmatpush1.msra.mxu0 0.0
        %1140 = vmatprep.subr.mxu0 0.0
        %1141 = vmatpush1.msra.mxu0 0.0
        %1142 = vmatprep.subr.mxu0 0.0
        %1143 = vmatpush1.msra.mxu0 0.0
        %1144 = vmatprep.subr.mxu0 0.0
        %1145 = vmatpush1.msra.mxu0 0.0
        %1146 = vmatprep.subr.mxu0 0.0
        %1147 = vmatpush1.msra.mxu0 0.0
        %1148 = vmatprep.subr.mxu0 0.0
        %1149 = vmatpush1.msra.mxu0 0.0
        %1150 = vmatprep.subr.mxu0 0.0
        %1151 = vmatpush1.msra.mxu0 0.0
        %1152 = vmatprep.subr.mxu0 0.0
        %1153 = vmatpush1.msra.mxu0 0.0
        %1154 = vmatprep.subr.mxu0 0.0
        %1155 = vmatpush1.msra.mxu0 0.0
        %1156 = vmatprep.subr.mxu0 0.0
        %1157 = vmatpush1.msra.mxu0 0.0
        %1158 = vmatprep.subr.mxu0 0.0
        %1159 = vmatpush1.msra.mxu0 0.0
        %1160 = vmatprep.subr.mxu0 0.0
        %1161 = vmatpush1.msra.mxu0 0.0
        %1162 = vmatprep.subr.mxu0 0.0
        %1163 = vmatpush1.msra.mxu0 0.0
        %1164 = vmatprep.subr.mxu0 0.0
        %1165 = vmatpush1.msra.mxu0 0.0
        %1166 = vmatprep.subr.mxu0 0.0
        %1167 = vmatpush1.msra.mxu0 0.0
        %1168 = vmatprep.subr.mxu0 0.0
        %1169 = vmatpush1.msra.mxu0 0.0
        %1170 = vmatprep.subr.mxu0 0.0
        %1171 = vmatpush1.msra.mxu0 0.0
        %1172 = vmatprep.subr.mxu0 0.0
        %1173 = vmatpush1.msra.mxu0 0.0
        %1174 = vmatprep.subr.mxu0 0.0
        %1175 = vmatpush1.msra.mxu0 0.0
        %1176 = vmatprep.subr.mxu0 0.0
        %1177 = vmatpush1.msra.mxu0 0.0
        %1178 = vmatprep.subr.mxu0 0.0
        %1179 = vmatpush1.msra.mxu0 0.0
        %1180 = vmatprep.subr.mxu0 0.0
        %1181 = vmatpush1.msra.mxu0 0.0
        %1182 = vmatprep.subr.mxu0 0.0
        %1183 = vmatpush1.msra.mxu0 0.0
        %1184 = vmatprep.subr.mxu0 0.0
        %1185 = vmatpush1.msra.mxu0 0.0
        %1186 = vmatprep.subr.mxu0 0.0
        %1187 = vmatpush1.msra.mxu0 0.0
        %1188 = vmatprep.mubr.f32.mxu0 0.0
        %1189 = vmatmul.mubr.f32.gmra.mrb[0].mxu0 %v1122
        %v1190 = vpop.f32.mrb[0].mxu0
        %v1191 = vadd.f32 0.0, %v1190
        %v1192 = vpop.f32.mrb[0].mxu0
        %1193 = vdwg.mxu0
        %v1195 = vsel %vm389, %v965, 0
        %1197 = vmatprep.subr.mxu0 0.0
        %1198 = vmatpush1.msra.mxu0 %v1046
        %1199 = vmatprep.subr.mxu0 0.0
        %1200 = vmatpush1.msra.mxu0 0.0
        %1201 = vmatprep.subr.mxu0 0.0
        %1202 = vmatpush1.msra.mxu0 0.0
        %1203 = vmatprep.subr.mxu0 0.0
        %1204 = vmatpush1.msra.mxu0 0.0
        %1205 = vmatprep.subr.mxu0 0.0
        %1206 = vmatpush1.msra.mxu0 0.0
        %1207 = vmatprep.subr.mxu0 0.0
        %1208 = vmatpush1.msra.mxu0 0.0
        %1209 = vmatprep.subr.mxu0 0.0
        %1210 = vmatpush1.msra.mxu0 0.0
        %1211 = vmatprep.subr.mxu0 0.0
        %1212 = vmatpush1.msra.mxu0 0.0
        %1213 = vmatprep.subr.mxu0 0.0
        %1214 = vmatpush1.msra.mxu0 0.0
        %1215 = vmatprep.subr.mxu0 0.0
        %1216 = vmatpush1.msra.mxu0 0.0
        %1217 = vmatprep.subr.mxu0 0.0
        %1218 = vmatpush1.msra.mxu0 0.0
        %1219 = vmatprep.subr.mxu0 0.0
        %1220 = vmatpush1.msra.mxu0 0.0
        %1221 = vmatprep.subr.mxu0 0.0
        %1222 = vmatpush1.msra.mxu0 0.0
        %1223 = vmatprep.subr.mxu0 0.0
        %1224 = vmatpush1.msra.mxu0 0.0
        %1225 = vmatprep.subr.mxu0 0.0
        %1226 = vmatpush1.msra.mxu0 0.0
        %1227 = vmatprep.subr.mxu0 0.0
        %1228 = vmatpush1.msra.mxu0 0.0
        %1229 = vmatprep.subr.mxu0 0.0
        %1230 = vmatpush1.msra.mxu0 0.0
        %1231 = vmatprep.subr.mxu0 0.0
        %1232 = vmatpush1.msra.mxu0 0.0
        %1233 = vmatprep.subr.mxu0 0.0
        %1234 = vmatpush1.msra.mxu0 0.0
        %1235 = vmatprep.subr.mxu0 0.0
        %1236 = vmatpush1.msra.mxu0 0.0
        %1237 = vmatprep.subr.mxu0 0.0
        %1238 = vmatpush1.msra.mxu0 0.0
        %1239 = vmatprep.subr.mxu0 0.0
        %1240 = vmatpush1.msra.mxu0 0.0
        %1241 = vmatprep.subr.mxu0 0.0
        %1242 = vmatpush1.msra.mxu0 0.0
        %1243 = vmatprep.subr.mxu0 0.0
        %1244 = vmatpush1.msra.mxu0 0.0
        %1245 = vmatprep.subr.mxu0 0.0
        %1246 = vmatpush1.msra.mxu0 0.0
        %1247 = vmatprep.subr.mxu0 0.0
        %1248 = vmatpush1.msra.mxu0 0.0
        %1249 = vmatprep.subr.mxu0 0.0
        %1250 = vmatpush1.msra.mxu0 0.0
        %1251 = vmatprep.subr.mxu0 0.0
        %1252 = vmatpush1.msra.mxu0 0.0
        %1253 = vmatprep.subr.mxu0 0.0
        %1254 = vmatpush1.msra.mxu0 0.0
        %1255 = vmatprep.subr.mxu0 0.0
        %1256 = vmatpush1.msra.mxu0 0.0
        %1257 = vmatprep.subr.mxu0 0.0
        %1258 = vmatpush1.msra.mxu0 0.0
        %1259 = vmatprep.subr.mxu0 0.0
        %1260 = vmatpush1.msra.mxu0 0.0
        %1261 = vmatprep.mubr.f32.mxu0 0.0
        %1262 = vmatmul.mubr.f32.gmra.mrb[0].mxu0 %v1195
        %v1263 = vpop.f32.mrb[0].mxu0
        %v1264 = vadd.f32 0.0, %v1263
        %v1265 = vpop.f32.mrb[0].mxu0
        %1266 = vdwg.mxu0
        %v1268 = vsel %vm389, %v1041, 0
        %1270 = vmatprep.subr.mxu0 0.0
        %1271 = vmatpush1.msra.mxu0 %v1047
        %1272 = vmatprep.subr.mxu0 0.0
        %1273 = vmatpush1.msra.mxu0 0.0
        %1274 = vmatprep.subr.mxu0 0.0
        %1275 = vmatpush1.msra.mxu0 0.0
        %1276 = vmatprep.subr.mxu0 0.0
        %1277 = vmatpush1.msra.mxu0 0.0
        %1278 = vmatprep.subr.mxu0 0.0
        %1279 = vmatpush1.msra.mxu0 0.0
        %1280 = vmatprep.subr.mxu0 0.0
        %1281 = vmatpush1.msra.mxu0 0.0
        %1282 = vmatprep.subr.mxu0 0.0
        %1283 = vmatpush1.msra.mxu0 0.0
        %1284 = vmatprep.subr.mxu0 0.0
        %1285 = vmatpush1.msra.mxu0 0.0
        %1286 = vmatprep.subr.mxu0 0.0
        %1287 = vmatpush1.msra.mxu0 0.0
        %1288 = vmatprep.subr.mxu0 0.0
        %1289 = vmatpush1.msra.mxu0 0.0
        %1290 = vmatprep.subr.mxu0 0.0
        %1291 = vmatpush1.msra.mxu0 0.0
        %1292 = vmatprep.subr.mxu0 0.0
        %1293 = vmatpush1.msra.mxu0 0.0
        %1294 = vmatprep.subr.mxu0 0.0
        %1295 = vmatpush1.msra.mxu0 0.0
        %1296 = vmatprep.subr.mxu0 0.0
        %1297 = vmatpush1.msra.mxu0 0.0
        %1298 = vmatprep.subr.mxu0 0.0
        %1299 = vmatpush1.msra.mxu0 0.0
        %1300 = vmatprep.subr.mxu0 0.0
        %1301 = vmatpush1.msra.mxu0 0.0
        %1302 = vmatprep.subr.mxu0 0.0
        %1303 = vmatpush1.msra.mxu0 0.0
        %1304 = vmatprep.subr.mxu0 0.0
        %1305 = vmatpush1.msra.mxu0 0.0
        %1306 = vmatprep.subr.mxu0 0.0
        %1307 = vmatpush1.msra.mxu0 0.0
        %1308 = vmatprep.subr.mxu0 0.0
        %1309 = vmatpush1.msra.mxu0 0.0
        %1310 = vmatprep.subr.mxu0 0.0
        %1311 = vmatpush1.msra.mxu0 0.0
        %1312 = vmatprep.subr.mxu0 0.0
        %1313 = vmatpush1.msra.mxu0 0.0
        %1314 = vmatprep.subr.mxu0 0.0
        %1315 = vmatpush1.msra.mxu0 0.0
        %1316 = vmatprep.subr.mxu0 0.0
        %1317 = vmatpush1.msra.mxu0 0.0
        %1318 = vmatprep.subr.mxu0 0.0
        %1319 = vmatpush1.msra.mxu0 0.0
        %1320 = vmatprep.subr.mxu0 0.0
        %1321 = vmatpush1.msra.mxu0 0.0
        %1322 = vmatprep.subr.mxu0 0.0
        %1323 = vmatpush1.msra.mxu0 0.0
        %1324 = vmatprep.subr.mxu0 0.0
        %1325 = vmatpush1.msra.mxu0 0.0
        %1326 = vmatprep.subr.mxu0 0.0
        %1327 = vmatpush1.msra.mxu0 0.0
        %1328 = vmatprep.subr.mxu0 0.0
        %1329 = vmatpush1.msra.mxu0 0.0
        %1330 = vmatprep.subr.mxu0 0.0
        %1331 = vmatpush1.msra.mxu0 0.0
        %1332 = vmatprep.subr.mxu0 0.0
        %1333 = vmatpush1.msra.mxu0 0.0
        %1334 = vmatprep.mubr.f32.mxu0 0.0
        %1335 = vmatmul.mubr.f32.gmra.mrb[0].mxu0 %v1268
        %v1336 = vpop.f32.mrb[0].mxu0
        %v1337 = vadd.f32 0.0, %v1336
        %v1338 = vpop.f32.mrb[0].mxu0
        %1339 = vdwg.mxu0
        %v1340 = vsel %vm275, %v1118, 0.0
        %v1341 = vsel %vm275, %v1191, 0.0
        %v1342 = vadd.f32 %v1340, %v1341
        %v1343 = vsel %vm275, %v1264, 0.0
        %v1344 = vadd.f32 %v1342, %v1343
        %v1345 = vsel %vm275, %v1337, 0.0
        %v1346 = vadd.f32 %v1344, %v1345
        %v1347 = vld [vmem:[%s4] sm:$0x1]
        %v1349 = vlaneseq
        %v1350 = vshrl.u32 %v1349, 7
        %v1351 = vsub.s32 0, %v1350
        %v1352 = vrot.slane %v1347, %v1351
        %v1354 = vadd.f32 %v1346, %v1352
        %1355 = vst.msk [vmem:[%s248] sm:$0xff] %vm275, %v1354
        %s1356 = sand.u32 %s142, 1
        %s1357 = scalar_lea.sflag [#allocation3], %s1356
        %s1358 = sand.u32 %s142, 1
        %s1359 = smul.addr %s1358, 8
        %s1360 = scalar_lea.vmem [#allocation2], %s1359
        %s1361 = sand.u32 %s168, 1
        %s1362 = scalar_lea.sflag [#allocation5], %s1361
        %s1363 = sand.u32 %s168, 1
        %s1364 = smul.addr %s1363, 32
        %s1365 = scalar_lea.vmem [#allocation4], %s1364
        // Predicated region
        $region41: #{multi_head_attention.1} parent=39 // pred_check
          %p1366 = pneg %p152
        $region42: #{multi_head_attention.1} parent=39 // pred_check_branch
          %1368 = sbr.rel (%p1366) target = $region44
        $region43: #{multi_head_attention.1} parent=39 // pred_region
          %s1370 = ssub.s32 128, 128
          %1371 = vsyncadd %s1357, %s1370
          %s1372 = smul.addr %s24, 128
          %s1373 = scalar_lea.hbm %s5, %s1372
          %s1375 = sshll.u32 %s1360, 4
          %s1376 = int_to_ptr.vmem [resolvable:$true] %s1375
          %1378 = dma.vmem_to_hbm [thread:$0]  %s1376, 128, %s1373, %s1357
        $region44: #{multi_head_attention.1} parent=39 // pred_fallthru
          _
        // Predicated region
        $region45: #{multi_head_attention.1} parent=39 // pred_check
          %p1379 = pneg %p178
        $region46: #{multi_head_attention.1} parent=39 // pred_check_branch
          %1381 = sbr.rel (%p1379) target = $region48
        $region47: #{multi_head_attention.1} parent=39 // pred_region
          %s1383 = ssub.s32 512, 512
          %1384 = vsyncadd %s1362, %s1383
          %s1385 = smul.addr %s24, 4
          %s1386 = smul.addr %s1385, 128
          %s1387 = scalar_lea.hbm %s6, %s1386
          %s1388 = sshll.u32 %s1365, 4
          %s1389 = int_to_ptr.vmem [resolvable:$true] %s1388
          %1394 = dma.vmem_to_hbm [thread:$0]  %s1389, 512, %s1387, %s1362, 128, 128, 8
        $region48: #{multi_head_attention.1} parent=39 // pred_fallthru
          _
      $region40: #{multi_head_attention.1} parent=5 // pred_fallthru
        _
      %p1395 = scmp.le.s32.totalorder 2, %s19
      // Predicated region
      $region49: #{multi_head_attention.1} parent=5 // pred_check
        %p1396 = pneg %p1395
      $region50: #{multi_head_attention.1} parent=5 // pred_check_branch
        %1398 = sbr.rel (%p1396) target = $region52
      $region51: #{multi_head_attention.1} parent=5 // pred_region
        %s1399 = ssub.s32 %s19, 2
        // Predicated region
        $region53: #{multi_head_attention.1} parent=51 // pred_check
          %p1400 = pneg %p158
        $region54: #{multi_head_attention.1} parent=51 // pred_check_branch
          %1402 = sbr.rel (%p1400) target = $region56
        $region55: #{multi_head_attention.1} parent=51 // pred_region
          %s1403 = sand.u32 %s143, 1
          %s1404 = scalar_lea.sflag [#allocation3], %s1403
          %s1405 = sand.u32 %s143, 1
          %s1406 = smul.addr %s1405, 8
          %s1407 = scalar_lea.vmem [#allocation2], %s1406
          %1408 = dma.done %s1404, 128
        $region56: #{multi_head_attention.1} parent=51 // pred_fallthru
          _
        // Predicated region
        $region57: #{multi_head_attention.1} parent=51 // pred_check
          %p1409 = pneg %p184
        $region58: #{multi_head_attention.1} parent=51 // pred_check_branch
          %1411 = sbr.rel (%p1409) target = $region60
        $region59: #{multi_head_attention.1} parent=51 // pred_region
          %s1412 = sand.u32 %s169, 1
          %s1413 = scalar_lea.sflag [#allocation5], %s1412
          %s1414 = sand.u32 %s169, 1
          %s1415 = smul.addr %s1414, 32
          %s1416 = scalar_lea.vmem [#allocation4], %s1415
          %1417 = dma.done %s1413, 512
        $region60: #{multi_head_attention.1} parent=51 // pred_fallthru
          _
      $region52: #{multi_head_attention.1} parent=5 // pred_fallthru
        _
    $region6: #{multi_head_attention.1} parent=1 // loop_footer
      %s23 = sadd.s32 1, %s19
    $region7: #{multi_head_attention.1} parent=1 // loop_footer_branch
      %18 = sbr.rel target = $region3
    $region8: #{multi_head_attention.1} parent=1 // loop_exit
      _
    %1418 = vsyncpa [#allocation3], 1
    %s1419 = scalar_lea.sflag [#allocation3], 1
    %1420 = vsyncpa %s1419, 1
    %1421 = vsyncpa [#allocation5], 1
    %s1422 = scalar_lea.sflag [#allocation5], 1
    %1423 = vsyncpa %s1422, 1

</llo_original>
